<compile_context>
chip_gen: v6e
topology: v6e:2x2x1
jax: 0.10.0
libtpu: 0.0.40
codegen_flags: <defaults>
</compile_context>

<pallas_src>
import math
import jax
import jax.numpy as jnp
from jax.experimental import pallas as pl
from jax.experimental.pallas import tpu as pltpu

# ---- small, module-consistent shapes ----
T = 8              # sequence length
D = 32             # input_dim (d_model)
H = 4              # nhead
DH = D // H        # head dim
HT = H * T         # stacked head*time extent used by block-diagonal attention
F = 64             # dim_feedforward (PyTorch default is 2048; kept small)
NUM_LAYERS = 2
NUM_CLASSES = 7
C_PAD = 128        # lane-dense padded classifier width
W3 = 3 * 128       # lane-aligned QKV width (Q at 0, K at 128, V at 256)
EPS = 1e-5         # LayerNorm eps (PyTorch default)

_VMEM = pl.BlockSpec(memory_space=pltpu.MemorySpace.VMEM)


def get_sinusoid_encoding(n_position, d_hid):
    position = jnp.arange(n_position, dtype=jnp.float32)[:, None]
    div_term = jnp.exp(
        jnp.arange(0, d_hid, 2, dtype=jnp.float32) * -(math.log(10000.0) / d_hid)
    )
    pe = jnp.zeros((n_position, d_hid), dtype=jnp.float32)
    pe = pe.at[:, 0::2].set(jnp.sin(position * div_term))
    pe = pe.at[:, 1::2].set(jnp.cos(position * div_term))
    return pe


def _layernorm_onepass(x, gamma, beta):
    # var = E[x^2] - mu^2 : the two lane-reductions are independent.
    mu = jnp.mean(x, axis=-1, keepdims=True)
    ms = jnp.mean(x * x, axis=-1, keepdims=True)
    var = ms - mu * mu
    return (x - mu) * jax.lax.rsqrt(var + EPS) * gamma + beta


def fused_forward_kernel(x_ref, pe_ref, cbias_ref, hblk_ref, dsum_ref,
                         wqkv_ref, wblob_ref, vecs_ref, wc_ref, bc_ref,
                         out_ref):
    """PE add + NUM_LAYERS post-norm causal encoder layers + classifier."""
    f32 = jnp.float32
    y = x_ref[...] + pe_ref[...]                                   # (T, D)

    cbias = cbias_ref[...]          # (T, HT)  additive causal bias (0 / -1e30)
    hblk = hblk_ref[...]            # (HT, D)  head-block mask (f32 0/1)
    dsum = dsum_ref[...]            # (HT, 128) per-head column-sum matrix

    for l in range(NUM_LAYERS):                                    # static unroll
        vl = vecs_ref[l]            # (8, W3) packed per-layer vectors
        bqkv = vl[0:1, :]           # (1, W3) (Q bias pre-scaled)
        bo = vl[1:2, 0:D]
        b1 = vl[2:3, 0:F]
        b2 = vl[3:4, 0:D]
        g1 = vl[4:5, 0:D]
        be1 = vl[5:6, 0:D]
        g2 = vl[6:7, 0:D]
        be2 = vl[7:8, 0:D]

        wo = wblob_ref[l, 0:D, 0:D]                # (D, D)
        w1 = wblob_ref[l, D:2 * D, 0:F]            # (D, F)
        w2 = wblob_ref[l, 2 * D:2 * D + F, 0:D]    # (F, D)

        # --- fused QKV projection (lane-aligned: Q@0, K@128, V@256) ---
        qkv = jnp.dot(y, wqkv_ref[l], preferred_element_type=f32) + bqkv
        q = qkv[:, 0:D]                                            # scaled
        k = qkv[:, 128:128 + D]
        v = qkv[:, 256:256 + D]

        # --- block-diagonal multi-head causal attention ---
        k_stack = hblk * jnp.tile(k, (H, 1))                       # (HT, D)
        v_stack = hblk * jnp.tile(v, (H, 1))                       # (HT, D)

        # s[i, h*T + j] = q_h[i] . k_h[j]   (single matmul over D)
        s = jax.lax.dot_general(q, k_stack, (((1,), (1,)), ((), ())),
                                preferred_element_type=f32) + cbias  # (T, HT)
        # global row max is a valid stabilizer for each per-head block
        p = jnp.exp(s - jnp.max(s, axis=-1, keepdims=True))

        # one MXU op for both the per-head-block denominators and P@V:
        # columns 0..D-1   -> per-head block sums (dsum)
        # columns 128..128+D-1 -> unnormalized attention output (v_stack)
        pv = jnp.dot(p, jnp.concatenate([dsum, v_stack], axis=1),
                     preferred_element_type=f32)                   # (T, 128+D)
        attn = pv[:, 128:128 + D] * pl.reciprocal(pv[:, 0:D], approx=True)
        attn = jnp.dot(attn, wo, preferred_element_type=f32) + bo  # (T, D)

        # residual + norm1 (post-norm)
        x1 = _layernorm_onepass(y + attn, g1, be1)

        # --- feed forward: linear1 -> relu -> linear2 ---
        hid = jnp.maximum(
            jnp.dot(x1, w1, preferred_element_type=f32) + b1, 0.0)
        ff = jnp.dot(hid, w2, preferred_element_type=f32) + b2

        # residual + norm2
        y = _layernorm_onepass(x1 + ff, g2, be2)

    # --- classifier, lane-dense (T, C_PAD) store; sliced in the wrapper ---
    out_ref[...] = jnp.dot(y, wc_ref[...], preferred_element_type=f32) + bc_ref[...]


def init_params(key):
    """Returns (kernel_params, raw_params).

    raw_params mirrors the PyTorch parameter layout (used by the pure-JAX
    reference); kernel_params are pre-transposed / scale-folded / packed.
    """
    def normal(k, shape, scale=0.02):
        return scale * jax.random.normal(k, shape, dtype=jnp.float32)

    keys = jax.random.split(key, NUM_LAYERS * 4 + 1)
    raw_layers = []
    for l in range(NUM_LAYERS):
        k0, k1, k2, k3 = keys[4 * l: 4 * l + 4]
        raw_layers.append(dict(
            wqkv=normal(k0, (3 * D, D)),              # in_proj_weight
            bqkv=jnp.zeros((3 * D,), jnp.float32),
            wo=normal(k1, (D, D)),                    # out_proj
            bo=jnp.zeros((D,), jnp.float32),
            w1=normal(k2, (F, D)),                    # linear1
            b1=jnp.zeros((F,), jnp.float32),
            w2=normal(k3, (D, F)),                    # linear2
            b2=jnp.zeros((D,), jnp.float32),
            g1=jnp.ones((D,), jnp.float32), be1=jnp.zeros((D,), jnp.float32),
            g2=jnp.ones((D,), jnp.float32), be2=jnp.zeros((D,), jnp.float32),
        ))
    wc = normal(keys[-1], (NUM_CLASSES, D))
    bc = jnp.zeros((NUM_CLASSES,), jnp.float32)
    raw = dict(layers=raw_layers, wc=wc, bc=bc)

    scale = 1.0 / math.sqrt(DH)

    def pack_wqkv(lp):
        w = jnp.zeros((D, W3), jnp.float32)
        w = w.at[:, 0:D].set(lp["wqkv"][0:D].T * scale)          # Q (pre-scaled)
        w = w.at[:, 128:128 + D].set(lp["wqkv"][D:2 * D].T)      # K
        w = w.at[:, 256:256 + D].set(lp["wqkv"][2 * D:3 * D].T)  # V
        return w

    def pack_wblob(lp):
        w = jnp.zeros((128, 128), jnp.float32)
        w = w.at[0:D, 0:D].set(lp["wo"].T)
        w = w.at[D:2 * D, 0:F].set(lp["w1"].T)
        w = w.at[2 * D:2 * D + F, 0:D].set(lp["w2"].T)
        return w

    def pack_vecs(lp):
        v = jnp.zeros((8, W3), jnp.float32)
        v = v.at[0, 0:D].set(lp["bqkv"][0:D] * scale)
        v = v.at[0, 128:128 + D].set(lp["bqkv"][D:2 * D])
        v = v.at[0, 256:256 + D].set(lp["bqkv"][2 * D:3 * D])
        v = v.at[1, 0:D].set(lp["bo"])
        v = v.at[2, 0:F].set(lp["b1"])
        v = v.at[3, 0:D].set(lp["b2"])
        v = v.at[4, 0:D].set(lp["g1"])
        v = v.at[5, 0:D].set(lp["be1"])
        v = v.at[6, 0:D].set(lp["g2"])
        v = v.at[7, 0:D].set(lp["be2"])
        return v

    # ---- hoisted constants (built once on the host) ----
    r = jnp.arange(HT)[:, None]
    c_d = jnp.arange(D)[None, :]
    hblk = ((r // T) == (c_d // DH)).astype(jnp.float32)          # (HT, D)
    c_128 = jnp.arange(128)[None, :]
    dsum = (((r // T) == (c_128 // DH)) & (c_128 < D)).astype(jnp.float32)  # (HT,128)
    rt = jnp.arange(T)[:, None]
    ct = jnp.arange(HT)[None, :]
    cbias = jnp.where((ct % T) <= rt, 0.0, -1e30).astype(jnp.float32)       # (T, HT)

    kern = dict(
        cbias=cbias, hblk=hblk, dsum=dsum,
        wqkv=jnp.stack([pack_wqkv(lp) for lp in raw_layers]),     # (L, D, 384)
        wblob=jnp.stack([pack_wblob(lp) for lp in raw_layers]),   # (L, 128, 128)
        vecs=jnp.stack([pack_vecs(lp) for lp in raw_layers]),     # (L, 8, 384)
        wc=jnp.zeros((D, C_PAD), jnp.float32).at[:, :NUM_CLASSES].set(wc.T),
        bc=jnp.zeros((1, C_PAD), jnp.float32).at[:, :NUM_CLASSES].set(bc),
    )
    return kern, raw


@jax.jit
def causal_transformer(x, kern):
    t, d = x.shape
    pe = get_sinusoid_encoding(t, d)
    args = [x, pe, kern["cbias"], kern["hblk"], kern["dsum"],
            kern["wqkv"], kern["wblob"], kern["vecs"], kern["wc"], kern["bc"]]
    out_pad = pl.pallas_call(
        fused_forward_kernel,
        out_shape=jax.ShapeDtypeStruct((t, C_PAD), jnp.float32),
        in_specs=[_VMEM] * len(args),
        out_specs=_VMEM,
    )(*args)
    return out_pad[:, :NUM_CLASSES]


def reference_forward(x, raw):
    """Pure-JAX reference mirroring the PyTorch module (inference)."""
    def layernorm(v, gamma, beta):
        mu = jnp.mean(v, axis=-1, keepdims=True)
        var = jnp.mean((v - mu) ** 2, axis=-1, keepdims=True)
        return (v - mu) * jax.lax.rsqrt(var + EPS) * gamma + beta

    t = x.shape[0]
    y = x + get_sinusoid_encoding(t, x.shape[1])
    causal = jnp.tril(jnp.ones((t, t), dtype=bool))
    scale = 1.0 / math.sqrt(DH)
    for lp in raw["layers"]:
        qkv = y @ lp["wqkv"].T + lp["bqkv"]
        q, k, v = qkv[:, :D], qkv[:, D:2 * D], qkv[:, 2 * D:]
        heads = []
        for h in range(H):
            qh = q[:, h * DH:(h + 1) * DH]
            kh = k[:, h * DH:(h + 1) * DH]
            vh = v[:, h * DH:(h + 1) * DH]
            s = (qh @ kh.T) * scale
            s = jnp.where(causal, s, -1e30)
            heads.append(jax.nn.softmax(s, axis=-1) @ vh)
        attn = jnp.concatenate(heads, axis=-1) @ lp["wo"].T + lp["bo"]
        x1 = layernorm(y + attn, lp["g1"], lp["be1"])
        ff = jnp.maximum(x1 @ lp["w1"].T + lp["b1"], 0.0) @ lp["w2"].T + lp["b2"]
        y = layernorm(x1 + ff, lp["g2"], lp["be2"])
    return y @ raw["wc"].T + raw["bc"]


if __name__ == "__main__":
    key = jax.random.PRNGKey(0)
    k_param, k_x = jax.random.split(key)
    kern, raw = init_params(k_param)
    x = jax.random.normal(k_x, (T, D), dtype=jnp.float32)   # (seq, input_dim)

    out = causal_transformer(x, kern)
    out = jax.block_until_ready(out)
    assert out.shape == (T, NUM_CLASSES), out.shape
    assert bool(jnp.all(jnp.isfinite(out)))

    ref = reference_forward(x, raw)
    assert bool(jnp.allclose(out, ref, atol=2e-3, rtol=2e-2)), (
        "max abs diff", float(jnp.max(jnp.abs(out - ref))))
    print("KERNEL_OK")
</pallas_src>

<mosaic_0001>
module attributes {stable_mosaic.version = 11 : i64} {
  func.func @fused_forward_kernel(%arg0: memref<8x32xf32, #tpu.memory_space<vmem>>, %arg1: memref<8x32xf32, #tpu.memory_space<vmem>>, %arg2: memref<8x32xf32, #tpu.memory_space<vmem>>, %arg3: memref<32x32xf32, #tpu.memory_space<vmem>>, %arg4: memref<32x128xf32, #tpu.memory_space<vmem>>, %arg5: memref<2x32x384xf32, #tpu.memory_space<vmem>>, %arg6: memref<2x128x128xf32, #tpu.memory_space<vmem>>, %arg7: memref<2x8x384xf32, #tpu.memory_space<vmem>>, %arg8: memref<32x128xf32, #tpu.memory_space<vmem>>, %arg9: memref<1x128xf32, #tpu.memory_space<vmem>>, %arg10: memref<8x128xf32, #tpu.memory_space<vmem>>) attributes {dimension_semantics = [], scalar_prefetch = 0 : i64, scratch_operands = 0 : i64, tpu.core_type = #tpu.core_type<tc>} {
    %c0 = arith.constant 0 : index
    %c0_0 = arith.constant 0 : index
    %0 = vector.load %arg0[%c0, %c0_0] : memref<8x32xf32, #tpu.memory_space<vmem>>, vector<8x32xf32>
    %c0_1 = arith.constant 0 : index
    %c0_2 = arith.constant 0 : index
    %1 = vector.load %arg1[%c0_1, %c0_2] : memref<8x32xf32, #tpu.memory_space<vmem>>, vector<8x32xf32>
    %2 = arith.addf %0, %1 : vector<8x32xf32>
    %c0_3 = arith.constant 0 : index
    %c0_4 = arith.constant 0 : index
    %3 = vector.load %arg2[%c0_3, %c0_4] : memref<8x32xf32, #tpu.memory_space<vmem>>, vector<8x32xf32>
    %c0_5 = arith.constant 0 : index
    %c0_6 = arith.constant 0 : index
    %4 = vector.load %arg3[%c0_5, %c0_6] : memref<32x32xf32, #tpu.memory_space<vmem>>, vector<32x32xf32>
    %c0_7 = arith.constant 0 : index
    %c0_8 = arith.constant 0 : index
    %5 = vector.load %arg4[%c0_7, %c0_8] : memref<32x128xf32, #tpu.memory_space<vmem>>, vector<32x128xf32>
    %c0_9 = arith.constant 0 : index
    %c0_10 = arith.constant 0 : index
    %c0_11 = arith.constant 0 : index
    %6 = vector.load %arg7[%c0_9, %c0_10, %c0_11] : memref<2x8x384xf32, #tpu.memory_space<vmem>>, vector<1x8x384xf32>
    %7 = vector.shape_cast %6 : vector<1x8x384xf32> to vector<8x384xf32>
    %8 = vector.extract_strided_slice %7 {offsets = [0, 0], sizes = [1, 384], strides = [1, 1]} : vector<8x384xf32> to vector<1x384xf32>
    %9 = vector.extract_strided_slice %7 {offsets = [1, 0], sizes = [1, 32], strides = [1, 1]} : vector<8x384xf32> to vector<1x32xf32>
    %10 = vector.extract_strided_slice %7 {offsets = [2, 0], sizes = [1, 64], strides = [1, 1]} : vector<8x384xf32> to vector<1x64xf32>
    %11 = vector.extract_strided_slice %7 {offsets = [3, 0], sizes = [1, 32], strides = [1, 1]} : vector<8x384xf32> to vector<1x32xf32>
    %12 = vector.extract_strided_slice %7 {offsets = [4, 0], sizes = [1, 32], strides = [1, 1]} : vector<8x384xf32> to vector<1x32xf32>
    %13 = vector.extract_strided_slice %7 {offsets = [5, 0], sizes = [1, 32], strides = [1, 1]} : vector<8x384xf32> to vector<1x32xf32>
    %14 = vector.extract_strided_slice %7 {offsets = [6, 0], sizes = [1, 32], strides = [1, 1]} : vector<8x384xf32> to vector<1x32xf32>
    %15 = vector.extract_strided_slice %7 {offsets = [7, 0], sizes = [1, 32], strides = [1, 1]} : vector<8x384xf32> to vector<1x32xf32>
    %c0_12 = arith.constant 0 : index
    %c0_13 = arith.constant 0 : index
    %c0_14 = arith.constant 0 : index
    %16 = vector.load %arg6[%c0_12, %c0_13, %c0_14] : memref<2x128x128xf32, #tpu.memory_space<vmem>>, vector<1x32x32xf32>
    %17 = vector.shape_cast %16 : vector<1x32x32xf32> to vector<32x32xf32>
    %c0_15 = arith.constant 0 : index
    %c32 = arith.constant 32 : index
    %c0_16 = arith.constant 0 : index
    %18 = vector.load %arg6[%c0_15, %c32, %c0_16] : memref<2x128x128xf32, #tpu.memory_space<vmem>>, vector<1x32x64xf32>
    %19 = vector.shape_cast %18 : vector<1x32x64xf32> to vector<32x64xf32>
    %c0_17 = arith.constant 0 : index
    %c64 = arith.constant 64 : index
    %c0_18 = arith.constant 0 : index
    %20 = vector.load %arg6[%c0_17, %c64, %c0_18] : memref<2x128x128xf32, #tpu.memory_space<vmem>>, vector<1x64x32xf32>
    %21 = vector.shape_cast %20 : vector<1x64x32xf32> to vector<64x32xf32>
    %c0_19 = arith.constant 0 : index
    %c0_20 = arith.constant 0 : index
    %c0_21 = arith.constant 0 : index
    %22 = vector.load %arg5[%c0_19, %c0_20, %c0_21] : memref<2x32x384xf32, #tpu.memory_space<vmem>>, vector<1x32x384xf32>
    %23 = vector.shape_cast %22 : vector<1x32x384xf32> to vector<32x384xf32>
    %cst = arith.constant dense<0.000000e+00> : vector<8x384xf32>
    %24 = tpu.matmul %2, %23, %cst {dimension_numbers = #tpu.dot_dimension_numbers<[1], [0], [0], [1], [0, 0, 1, 1], [], []>} : vector<8x32xf32>, vector<32x384xf32>, vector<8x384xf32> -> vector<8x384xf32>
    %25 = vector.broadcast %8 : vector<1x384xf32> to vector<8x384xf32>
    %26 = arith.addf %24, %25 : vector<8x384xf32>
    %27 = vector.extract_strided_slice %26 {offsets = [0, 0], sizes = [8, 32], strides = [1, 1]} : vector<8x384xf32> to vector<8x32xf32>
    %28 = vector.extract_strided_slice %26 {offsets = [0, 128], sizes = [8, 32], strides = [1, 1]} : vector<8x384xf32> to vector<8x32xf32>
    %29 = vector.extract_strided_slice %26 {offsets = [0, 256], sizes = [8, 32], strides = [1, 1]} : vector<8x384xf32> to vector<8x32xf32>
    %30 = tpu.concatenate %28, %28, %28, %28 in 0 : vector<8x32xf32>, vector<8x32xf32>, vector<8x32xf32>, vector<8x32xf32> -> vector<32x32xf32>
    %31 = arith.mulf %4, %30 : vector<32x32xf32>
    %32 = tpu.concatenate %29, %29, %29, %29 in 0 : vector<8x32xf32>, vector<8x32xf32>, vector<8x32xf32>, vector<8x32xf32> -> vector<32x32xf32>
    %33 = arith.mulf %4, %32 : vector<32x32xf32>
    %cst_22 = arith.constant dense<0.000000e+00> : vector<8x32xf32>
    %34 = tpu.matmul %27, %31, %cst_22 {dimension_numbers = #tpu.dot_dimension_numbers<[1], [1], [0], [0], [0, 0, 1, 0], [], []>} : vector<8x32xf32>, vector<32x32xf32>, vector<8x32xf32> -> vector<8x32xf32>
    %35 = arith.addf %34, %3 : vector<8x32xf32>
    %cst_23 = arith.constant dense<0xFF800000> : vector<8xf32>
    %36 = vector.multi_reduction <maximumf>, %35, %cst_23 [1] : vector<8x32xf32> to vector<8xf32>
    %37 = vector.shape_cast %36 : vector<8xf32> to vector<8x1xf32>
    %38 = vector.broadcast %37 : vector<8x1xf32> to vector<8x32xf32>
    %39 = arith.subf %35, %38 : vector<8x32xf32>
    %40 = math.exp %39 : vector<8x32xf32>
    %41 = tpu.concatenate %5, %33 in 1 : vector<32x128xf32>, vector<32x32xf32> -> vector<32x160xf32>
    %cst_24 = arith.constant dense<0.000000e+00> : vector<8x160xf32>
    %42 = tpu.matmul %40, %41, %cst_24 {dimension_numbers = #tpu.dot_dimension_numbers<[1], [0], [0], [1], [0, 0, 1, 1], [], []>} : vector<8x32xf32>, vector<32x160xf32>, vector<8x160xf32> -> vector<8x160xf32>
    %43 = vector.extract_strided_slice %42 {offsets = [0, 128], sizes = [8, 32], strides = [1, 1]} : vector<8x160xf32> to vector<8x32xf32>
    %44 = vector.extract_strided_slice %42 {offsets = [0, 0], sizes = [8, 32], strides = [1, 1]} : vector<8x160xf32> to vector<8x32xf32>
    %45 = tpu.reciprocal %44 {approx = true} : vector<8x32xf32> -> vector<8x32xf32>
    %46 = arith.mulf %43, %45 : vector<8x32xf32>
    %cst_25 = arith.constant dense<0.000000e+00> : vector<8x32xf32>
    %47 = tpu.matmul %46, %17, %cst_25 {dimension_numbers = #tpu.dot_dimension_numbers<[1], [0], [0], [1], [0, 0, 1, 1], [], []>} : vector<8x32xf32>, vector<32x32xf32>, vector<8x32xf32> -> vector<8x32xf32>
    %48 = vector.broadcast %9 : vector<1x32xf32> to vector<8x32xf32>
    %49 = arith.addf %47, %48 : vector<8x32xf32>
    %50 = arith.addf %2, %49 : vector<8x32xf32>
    %cst_26 = arith.constant dense<0.000000e+00> : vector<8xf32>
    %51 = vector.multi_reduction <add>, %50, %cst_26 [1] : vector<8x32xf32> to vector<8xf32>
    %52 = vector.shape_cast %51 : vector<8xf32> to vector<8x1xf32>
    %cst_27 = arith.constant 3.200000e+01 : f32
    %53 = vector.broadcast %cst_27 : f32 to vector<8x1xf32>
    %54 = arith.divf %52, %53 : vector<8x1xf32>
    %55 = arith.mulf %50, %50 : vector<8x32xf32>
    %cst_28 = arith.constant dense<0.000000e+00> : vector<8xf32>
    %56 = vector.multi_reduction <add>, %55, %cst_28 [1] : vector<8x32xf32> to vector<8xf32>
    %57 = vector.shape_cast %56 : vector<8xf32> to vector<8x1xf32>
    %cst_29 = arith.constant 3.200000e+01 : f32
    %58 = vector.broadcast %cst_29 : f32 to vector<8x1xf32>
    %59 = arith.divf %57, %58 : vector<8x1xf32>
    %60 = arith.mulf %54, %54 : vector<8x1xf32>
    %61 = arith.subf %59, %60 : vector<8x1xf32>
    %62 = vector.broadcast %54 : vector<8x1xf32> to vector<8x32xf32>
    %63 = arith.subf %50, %62 : vector<8x32xf32>
    %cst_30 = arith.constant 9.99999974E-6 : f32
    %64 = vector.broadcast %cst_30 : f32 to vector<8x1xf32>
    %65 = arith.addf %61, %64 : vector<8x1xf32>
    %66 = math.rsqrt %65 : vector<8x1xf32>
    %67 = vector.broadcast %66 : vector<8x1xf32> to vector<8x32xf32>
    %68 = arith.mulf %63, %67 : vector<8x32xf32>
    %69 = vector.broadcast %12 : vector<1x32xf32> to vector<8x32xf32>
    %70 = arith.mulf %68, %69 : vector<8x32xf32>
    %71 = vector.broadcast %13 : vector<1x32xf32> to vector<8x32xf32>
    %72 = arith.addf %70, %71 : vector<8x32xf32>
    %cst_31 = arith.constant dense<0.000000e+00> : vector<8x64xf32>
    %73 = tpu.matmul %72, %19, %cst_31 {dimension_numbers = #tpu.dot_dimension_numbers<[1], [0], [0], [1], [0, 0, 1, 1], [], []>} : vector<8x32xf32>, vector<32x64xf32>, vector<8x64xf32> -> vector<8x64xf32>
    %74 = vector.broadcast %10 : vector<1x64xf32> to vector<8x64xf32>
    %75 = arith.addf %73, %74 : vector<8x64xf32>
    %cst_32 = arith.constant 0.000000e+00 : f32
    %76 = vector.broadcast %cst_32 : f32 to vector<8x64xf32>
    %77 = arith.maximumf %75, %76 : vector<8x64xf32>
    %cst_33 = arith.constant dense<0.000000e+00> : vector<8x32xf32>
    %78 = tpu.matmul %77, %21, %cst_33 {dimension_numbers = #tpu.dot_dimension_numbers<[1], [0], [0], [1], [0, 0, 1, 1], [], []>} : vector<8x64xf32>, vector<64x32xf32>, vector<8x32xf32> -> vector<8x32xf32>
    %79 = vector.broadcast %11 : vector<1x32xf32> to vector<8x32xf32>
    %80 = arith.addf %78, %79 : vector<8x32xf32>
    %81 = arith.addf %72, %80 : vector<8x32xf32>
    %cst_34 = arith.constant dense<0.000000e+00> : vector<8xf32>
    %82 = vector.multi_reduction <add>, %81, %cst_34 [1] : vector<8x32xf32> to vector<8xf32>
    %83 = vector.shape_cast %82 : vector<8xf32> to vector<8x1xf32>
    %cst_35 = arith.constant 3.200000e+01 : f32
    %84 = vector.broadcast %cst_35 : f32 to vector<8x1xf32>
    %85 = arith.divf %83, %84 : vector<8x1xf32>
    %86 = arith.mulf %81, %81 : vector<8x32xf32>
    %cst_36 = arith.constant dense<0.000000e+00> : vector<8xf32>
    %87 = vector.multi_reduction <add>, %86, %cst_36 [1] : vector<8x32xf32> to vector<8xf32>
    %88 = vector.shape_cast %87 : vector<8xf32> to vector<8x1xf32>
    %cst_37 = arith.constant 3.200000e+01 : f32
    %89 = vector.broadcast %cst_37 : f32 to vector<8x1xf32>
    %90 = arith.divf %88, %89 : vector<8x1xf32>
    %91 = arith.mulf %85, %85 : vector<8x1xf32>
    %92 = arith.subf %90, %91 : vector<8x1xf32>
    %93 = vector.broadcast %85 : vector<8x1xf32> to vector<8x32xf32>
    %94 = arith.subf %81, %93 : vector<8x32xf32>
    %cst_38 = arith.constant 9.99999974E-6 : f32
    %95 = vector.broadcast %cst_38 : f32 to vector<8x1xf32>
    %96 = arith.addf %92, %95 : vector<8x1xf32>
    %97 = math.rsqrt %96 : vector<8x1xf32>
    %98 = vector.broadcast %97 : vector<8x1xf32> to vector<8x32xf32>
    %99 = arith.mulf %94, %98 : vector<8x32xf32>
    %100 = vector.broadcast %14 : vector<1x32xf32> to vector<8x32xf32>
    %101 = arith.mulf %99, %100 : vector<8x32xf32>
    %102 = vector.broadcast %15 : vector<1x32xf32> to vector<8x32xf32>
    %103 = arith.addf %101, %102 : vector<8x32xf32>
    %c1 = arith.constant 1 : index
    %c0_39 = arith.constant 0 : index
    %c0_40 = arith.constant 0 : index
    %104 = vector.load %arg7[%c1, %c0_39, %c0_40] : memref<2x8x384xf32, #tpu.memory_space<vmem>>, vector<1x8x384xf32>
    %105 = vector.shape_cast %104 : vector<1x8x384xf32> to vector<8x384xf32>
    %106 = vector.extract_strided_slice %105 {offsets = [0, 0], sizes = [1, 384], strides = [1, 1]} : vector<8x384xf32> to vector<1x384xf32>
    %107 = vector.extract_strided_slice %105 {offsets = [1, 0], sizes = [1, 32], strides = [1, 1]} : vector<8x384xf32> to vector<1x32xf32>
    %108 = vector.extract_strided_slice %105 {offsets = [2, 0], sizes = [1, 64], strides = [1, 1]} : vector<8x384xf32> to vector<1x64xf32>
    %109 = vector.extract_strided_slice %105 {offsets = [3, 0], sizes = [1, 32], strides = [1, 1]} : vector<8x384xf32> to vector<1x32xf32>
    %110 = vector.extract_strided_slice %105 {offsets = [4, 0], sizes = [1, 32], strides = [1, 1]} : vector<8x384xf32> to vector<1x32xf32>
    %111 = vector.extract_strided_slice %105 {offsets = [5, 0], sizes = [1, 32], strides = [1, 1]} : vector<8x384xf32> to vector<1x32xf32>
    %112 = vector.extract_strided_slice %105 {offsets = [6, 0], sizes = [1, 32], strides = [1, 1]} : vector<8x384xf32> to vector<1x32xf32>
    %113 = vector.extract_strided_slice %105 {offsets = [7, 0], sizes = [1, 32], strides = [1, 1]} : vector<8x384xf32> to vector<1x32xf32>
    %c1_41 = arith.constant 1 : index
    %c0_42 = arith.constant 0 : index
    %c0_43 = arith.constant 0 : index
    %114 = vector.load %arg6[%c1_41, %c0_42, %c0_43] : memref<2x128x128xf32, #tpu.memory_space<vmem>>, vector<1x32x32xf32>
    %115 = vector.shape_cast %114 : vector<1x32x32xf32> to vector<32x32xf32>
    %c1_44 = arith.constant 1 : index
    %c32_45 = arith.constant 32 : index
    %c0_46 = arith.constant 0 : index
    %116 = vector.load %arg6[%c1_44, %c32_45, %c0_46] : memref<2x128x128xf32, #tpu.memory_space<vmem>>, vector<1x32x64xf32>
    %117 = vector.shape_cast %116 : vector<1x32x64xf32> to vector<32x64xf32>
    %c1_47 = arith.constant 1 : index
    %c64_48 = arith.constant 64 : index
    %c0_49 = arith.constant 0 : index
    %118 = vector.load %arg6[%c1_47, %c64_48, %c0_49] : memref<2x128x128xf32, #tpu.memory_space<vmem>>, vector<1x64x32xf32>
    %119 = vector.shape_cast %118 : vector<1x64x32xf32> to vector<64x32xf32>
    %c1_50 = arith.constant 1 : index
    %c0_51 = arith.constant 0 : index
    %c0_52 = arith.constant 0 : index
    %120 = vector.load %arg5[%c1_50, %c0_51, %c0_52] : memref<2x32x384xf32, #tpu.memory_space<vmem>>, vector<1x32x384xf32>
    %121 = vector.shape_cast %120 : vector<1x32x384xf32> to vector<32x384xf32>
    %cst_53 = arith.constant dense<0.000000e+00> : vector<8x384xf32>
    %122 = tpu.matmul %103, %121, %cst_53 {dimension_numbers = #tpu.dot_dimension_numbers<[1], [0], [0], [1], [0, 0, 1, 1], [], []>} : vector<8x32xf32>, vector<32x384xf32>, vector<8x384xf32> -> vector<8x384xf32>
    %123 = vector.broadcast %106 : vector<1x384xf32> to vector<8x384xf32>
    %124 = arith.addf %122, %123 : vector<8x384xf32>
    %125 = vector.extract_strided_slice %124 {offsets = [0, 0], sizes = [8, 32], strides = [1, 1]} : vector<8x384xf32> to vector<8x32xf32>
    %126 = vector.extract_strided_slice %124 {offsets = [0, 128], sizes = [8, 32], strides = [1, 1]} : vector<8x384xf32> to vector<8x32xf32>
    %127 = vector.extract_strided_slice %124 {offsets = [0, 256], sizes = [8, 32], strides = [1, 1]} : vector<8x384xf32> to vector<8x32xf32>
    %128 = tpu.concatenate %126, %126, %126, %126 in 0 : vector<8x32xf32>, vector<8x32xf32>, vector<8x32xf32>, vector<8x32xf32> -> vector<32x32xf32>
    %129 = arith.mulf %4, %128 : vector<32x32xf32>
    %130 = tpu.concatenate %127, %127, %127, %127 in 0 : vector<8x32xf32>, vector<8x32xf32>, vector<8x32xf32>, vector<8x32xf32> -> vector<32x32xf32>
    %131 = arith.mulf %4, %130 : vector<32x32xf32>
    %cst_54 = arith.constant dense<0.000000e+00> : vector<8x32xf32>
    %132 = tpu.matmul %125, %129, %cst_54 {dimension_numbers = #tpu.dot_dimension_numbers<[1], [1], [0], [0], [0, 0, 1, 0], [], []>} : vector<8x32xf32>, vector<32x32xf32>, vector<8x32xf32> -> vector<8x32xf32>
    %133 = arith.addf %132, %3 : vector<8x32xf32>
    %cst_55 = arith.constant dense<0xFF800000> : vector<8xf32>
    %134 = vector.multi_reduction <maximumf>, %133, %cst_55 [1] : vector<8x32xf32> to vector<8xf32>
    %135 = vector.shape_cast %134 : vector<8xf32> to vector<8x1xf32>
    %136 = vector.broadcast %135 : vector<8x1xf32> to vector<8x32xf32>
    %137 = arith.subf %133, %136 : vector<8x32xf32>
    %138 = math.exp %137 : vector<8x32xf32>
    %139 = tpu.concatenate %5, %131 in 1 : vector<32x128xf32>, vector<32x32xf32> -> vector<32x160xf32>
    %cst_56 = arith.constant dense<0.000000e+00> : vector<8x160xf32>
    %140 = tpu.matmul %138, %139, %cst_56 {dimension_numbers = #tpu.dot_dimension_numbers<[1], [0], [0], [1], [0, 0, 1, 1], [], []>} : vector<8x32xf32>, vector<32x160xf32>, vector<8x160xf32> -> vector<8x160xf32>
    %141 = vector.extract_strided_slice %140 {offsets = [0, 128], sizes = [8, 32], strides = [1, 1]} : vector<8x160xf32> to vector<8x32xf32>
    %142 = vector.extract_strided_slice %140 {offsets = [0, 0], sizes = [8, 32], strides = [1, 1]} : vector<8x160xf32> to vector<8x32xf32>
    %143 = tpu.reciprocal %142 {approx = true} : vector<8x32xf32> -> vector<8x32xf32>
    %144 = arith.mulf %141, %143 : vector<8x32xf32>
    %cst_57 = arith.constant dense<0.000000e+00> : vector<8x32xf32>
    %145 = tpu.matmul %144, %115, %cst_57 {dimension_numbers = #tpu.dot_dimension_numbers<[1], [0], [0], [1], [0, 0, 1, 1], [], []>} : vector<8x32xf32>, vector<32x32xf32>, vector<8x32xf32> -> vector<8x32xf32>
    %146 = vector.broadcast %107 : vector<1x32xf32> to vector<8x32xf32>
    %147 = arith.addf %145, %146 : vector<8x32xf32>
    %148 = arith.addf %103, %147 : vector<8x32xf32>
    %cst_58 = arith.constant dense<0.000000e+00> : vector<8xf32>
    %149 = vector.multi_reduction <add>, %148, %cst_58 [1] : vector<8x32xf32> to vector<8xf32>
    %150 = vector.shape_cast %149 : vector<8xf32> to vector<8x1xf32>
    %cst_59 = arith.constant 3.200000e+01 : f32
    %151 = vector.broadcast %cst_59 : f32 to vector<8x1xf32>
    %152 = arith.divf %150, %151 : vector<8x1xf32>
    %153 = arith.mulf %148, %148 : vector<8x32xf32>
    %cst_60 = arith.constant dense<0.000000e+00> : vector<8xf32>
    %154 = vector.multi_reduction <add>, %153, %cst_60 [1] : vector<8x32xf32> to vector<8xf32>
    %155 = vector.shape_cast %154 : vector<8xf32> to vector<8x1xf32>
    %cst_61 = arith.constant 3.200000e+01 : f32
    %156 = vector.broadcast %cst_61 : f32 to vector<8x1xf32>
    %157 = arith.divf %155, %156 : vector<8x1xf32>
    %158 = arith.mulf %152, %152 : vector<8x1xf32>
    %159 = arith.subf %157, %158 : vector<8x1xf32>
    %160 = vector.broadcast %152 : vector<8x1xf32> to vector<8x32xf32>
    %161 = arith.subf %148, %160 : vector<8x32xf32>
    %cst_62 = arith.constant 9.99999974E-6 : f32
    %162 = vector.broadcast %cst_62 : f32 to vector<8x1xf32>
    %163 = arith.addf %159, %162 : vector<8x1xf32>
    %164 = math.rsqrt %163 : vector<8x1xf32>
    %165 = vector.broadcast %164 : vector<8x1xf32> to vector<8x32xf32>
    %166 = arith.mulf %161, %165 : vector<8x32xf32>
    %167 = vector.broadcast %110 : vector<1x32xf32> to vector<8x32xf32>
    %168 = arith.mulf %166, %167 : vector<8x32xf32>
    %169 = vector.broadcast %111 : vector<1x32xf32> to vector<8x32xf32>
    %170 = arith.addf %168, %169 : vector<8x32xf32>
    %cst_63 = arith.constant dense<0.000000e+00> : vector<8x64xf32>
    %171 = tpu.matmul %170, %117, %cst_63 {dimension_numbers = #tpu.dot_dimension_numbers<[1], [0], [0], [1], [0, 0, 1, 1], [], []>} : vector<8x32xf32>, vector<32x64xf32>, vector<8x64xf32> -> vector<8x64xf32>
    %172 = vector.broadcast %108 : vector<1x64xf32> to vector<8x64xf32>
    %173 = arith.addf %171, %172 : vector<8x64xf32>
    %cst_64 = arith.constant 0.000000e+00 : f32
    %174 = vector.broadcast %cst_64 : f32 to vector<8x64xf32>
    %175 = arith.maximumf %173, %174 : vector<8x64xf32>
    %cst_65 = arith.constant dense<0.000000e+00> : vector<8x32xf32>
    %176 = tpu.matmul %175, %119, %cst_65 {dimension_numbers = #tpu.dot_dimension_numbers<[1], [0], [0], [1], [0, 0, 1, 1], [], []>} : vector<8x64xf32>, vector<64x32xf32>, vector<8x32xf32> -> vector<8x32xf32>
    %177 = vector.broadcast %109 : vector<1x32xf32> to vector<8x32xf32>
    %178 = arith.addf %176, %177 : vector<8x32xf32>
    %179 = arith.addf %170, %178 : vector<8x32xf32>
    %cst_66 = arith.constant dense<0.000000e+00> : vector<8xf32>
    %180 = vector.multi_reduction <add>, %179, %cst_66 [1] : vector<8x32xf32> to vector<8xf32>
    %181 = vector.shape_cast %180 : vector<8xf32> to vector<8x1xf32>
    %cst_67 = arith.constant 3.200000e+01 : f32
    %182 = vector.broadcast %cst_67 : f32 to vector<8x1xf32>
    %183 = arith.divf %181, %182 : vector<8x1xf32>
    %184 = arith.mulf %179, %179 : vector<8x32xf32>
    %cst_68 = arith.constant dense<0.000000e+00> : vector<8xf32>
    %185 = vector.multi_reduction <add>, %184, %cst_68 [1] : vector<8x32xf32> to vector<8xf32>
    %186 = vector.shape_cast %185 : vector<8xf32> to vector<8x1xf32>
    %cst_69 = arith.constant 3.200000e+01 : f32
    %187 = vector.broadcast %cst_69 : f32 to vector<8x1xf32>
    %188 = arith.divf %186, %187 : vector<8x1xf32>
    %189 = arith.mulf %183, %183 : vector<8x1xf32>
    %190 = arith.subf %188, %189 : vector<8x1xf32>
    %191 = vector.broadcast %183 : vector<8x1xf32> to vector<8x32xf32>
    %192 = arith.subf %179, %191 : vector<8x32xf32>
    %cst_70 = arith.constant 9.99999974E-6 : f32
    %193 = vector.broadcast %cst_70 : f32 to vector<8x1xf32>
    %194 = arith.addf %190, %193 : vector<8x1xf32>
    %195 = math.rsqrt %194 : vector<8x1xf32>
    %196 = vector.broadcast %195 : vector<8x1xf32> to vector<8x32xf32>
    %197 = arith.mulf %192, %196 : vector<8x32xf32>
    %198 = vector.broadcast %112 : vector<1x32xf32> to vector<8x32xf32>
    %199 = arith.mulf %197, %198 : vector<8x32xf32>
    %200 = vector.broadcast %113 : vector<1x32xf32> to vector<8x32xf32>
    %201 = arith.addf %199, %200 : vector<8x32xf32>
    %c0_71 = arith.constant 0 : index
    %c0_72 = arith.constant 0 : index
    %202 = vector.load %arg8[%c0_71, %c0_72] : memref<32x128xf32, #tpu.memory_space<vmem>>, vector<32x128xf32>
    %cst_73 = arith.constant dense<0.000000e+00> : vector<8x128xf32>
    %203 = tpu.matmul %201, %202, %cst_73 {dimension_numbers = #tpu.dot_dimension_numbers<[1], [0], [0], [1], [0, 0, 1, 1], [], []>} : vector<8x32xf32>, vector<32x128xf32>, vector<8x128xf32> -> vector<8x128xf32>
    %c0_74 = arith.constant 0 : index
    %c0_75 = arith.constant 0 : index
    %204 = vector.load %arg9[%c0_74, %c0_75] : memref<1x128xf32, #tpu.memory_space<vmem>>, vector<1x128xf32>
    %205 = vector.broadcast %204 : vector<1x128xf32> to vector<8x128xf32>
    %206 = arith.addf %203, %205 : vector<8x128xf32>
    %c0_76 = arith.constant 0 : index
    %c0_77 = arith.constant 0 : index
    %207 = vector.load %arg10[%c0_76, %c0_77] : memref<8x128xf32, #tpu.memory_space<vmem>>, vector<8x128xf32>
    tpu.vector_store %arg10[%c0_76, %c0_77], %206 {strides = array<i32>} : memref<8x128xf32, #tpu.memory_space<vmem>>, vector<8x128xf32>,
    return
  }
}

</mosaic_0001>

<llo_original>
// kernel: causal_transformer.1
$region0: #{causal_transformer.1}
  #allocation0 [shape = 'u32[]', space=smem, size = 0x4, offset = 0x4, fixed_abs, tag = 'smem constant byte address 0x4 - core index']
  #allocation1 [shape = 'u32[144,128]{1,0:T(1,128)}', space=vmem, size = 0x12000, scoped, tag = 'internal scratch']
  %s0 = inlined_call_operand.hbm [shape: f32[8,32], index: 0, kind: input, shape index: {}]
  %s1 = inlined_call_operand.vmem [shape: f32[8,32], index: 1, kind: input, shape index: {}]
  %s2 = inlined_call_operand.hbm [shape: f32[8,32], index: 2, kind: input, shape index: {}]
  %s3 = inlined_call_operand.vmem [shape: f32[32,32], index: 3, kind: input, shape index: {}]
  %s4 = inlined_call_operand.vmem [shape: f32[32,128], index: 4, kind: input, shape index: {}]
  %s5 = inlined_call_operand.hbm [shape: f32[2,32,384], index: 5, kind: input, shape index: {}]
  %s6 = inlined_call_operand.hbm [shape: f32[2,128,128], index: 6, kind: input, shape index: {}]
  %s7 = inlined_call_operand.vmem [shape: f32[2,8,384], index: 7, kind: input, shape index: {}]
  %s8 = inlined_call_operand.hbm [shape: f32[32,128], index: 8, kind: input, shape index: {}]
  %s9 = inlined_call_operand.vmem [shape: f32[1,128], index: 9, kind: input, shape index: {}]
  %s10 = inlined_call_operand.hbm [shape: f32[8,128], index: 10, kind: output, shape index: {}]
  %s11 = sld [smem:[#allocation0]]
  $region70: #{causal_transformer.1} parent=0
    _
  %s13 = ssub.s32 1, %s11
  %s14 = scalar_select 0, %s13, %s11
  $region1: #{causal_transformer.1} parent=0
    #allocation2 [shape = 'u8[4096]{0}', space=vmem, size = 0x1000, scoped, tag = 'input window, operand 0, single buffered']
    #allocation3 [shape = 's32[1]{0}', space=sflag, size = 0x4, scoped, tag = 'scoped memory for causal_transformer.1']
    #allocation4 [shape = 's32[1]{0}', space=sflag, size = 0x4, scoped, tag = 'scoped memory for causal_transformer.1']
    #allocation5 [shape = 'u8[4096]{0}', space=vmem, size = 0x1000, scoped, tag = 'input window, operand 2, single buffered']
    #allocation6 [shape = 's32[1]{0}', space=sflag, size = 0x4, scoped, tag = 'scoped memory for causal_transformer.1']
    #allocation7 [shape = 'u8[98304]{0}', space=vmem, size = 0x18000, scoped, tag = 'input window, operand 5, single buffered']
    #allocation8 [shape = 'u8[131072]{0}', space=vmem, size = 0x20000, scoped, tag = 'input window, operand 6, single buffered']
    #allocation9 [shape = 's32[1]{0}', space=sflag, size = 0x4, scoped, tag = 'scoped memory for causal_transformer.1']
    #allocation10 [shape = 'u8[16384]{0}', space=vmem, size = 0x4000, scoped, tag = 'input window, operand 8, single buffered']
    #allocation11 [shape = 'u8[4096]{0}', space=vmem, size = 0x1000, scoped, tag = 'output window, operand 0, single buffered']
    %15 = vsyncpa [#allocation3], 0
    %16 = vsyncpa [#allocation6], 0
    %17 = vsyncpa [#allocation9], 0
    %18 = vsyncpa [#allocation4], 0
    // Predicated region
    $region2: #{causal_transformer.1} parent=1 // pred_check
      _
    $region3: #{causal_transformer.1} parent=1 // pred_check_branch
      %20 = sbr.rel (0) target = $region5
    $region4: #{causal_transformer.1} parent=1 // pred_region
      %s22 = ssub.s32 128, 128
      %23 = vsyncadd [#allocation3], %s22
      %s25 = sshll.u32 [#allocation2], 4
      %s26 = int_to_ptr.vmem [resolvable:$true] %s25
      %28 = dma.hbm_to_vmem [thread:$0]  %s0, 128, %s26, [#allocation3]
    $region5: #{causal_transformer.1} parent=1 // pred_fallthru
      _
    // Predicated region
    $region6: #{causal_transformer.1} parent=1 // pred_check
      _
    $region7: #{causal_transformer.1} parent=1 // pred_check_branch
      %30 = sbr.rel (0) target = $region9
    $region8: #{causal_transformer.1} parent=1 // pred_region
      _
    $region9: #{causal_transformer.1} parent=1 // pred_fallthru
      _
    // Predicated region
    $region10: #{causal_transformer.1} parent=1 // pred_check
      _
    $region11: #{causal_transformer.1} parent=1 // pred_check_branch
      %32 = sbr.rel (0) target = $region13
    $region12: #{causal_transformer.1} parent=1 // pred_region
      %s34 = ssub.s32 128, 128
      %35 = vsyncadd [#allocation6], %s34
      %s37 = sshll.u32 [#allocation5], 4
      %s38 = int_to_ptr.vmem [resolvable:$true] %s37
      %40 = dma.hbm_to_vmem [thread:$0]  %s2, 128, %s38, [#allocation6]
    $region13: #{causal_transformer.1} parent=1 // pred_fallthru
      _
    // Predicated region
    $region14: #{causal_transformer.1} parent=1 // pred_check
      _
    $region15: #{causal_transformer.1} parent=1 // pred_check_branch
      %42 = sbr.rel (0) target = $region17
    $region16: #{causal_transformer.1} parent=1 // pred_region
      _
    $region17: #{causal_transformer.1} parent=1 // pred_fallthru
      _
    // Predicated region
    $region18: #{causal_transformer.1} parent=1 // pred_check
      _
    $region19: #{causal_transformer.1} parent=1 // pred_check_branch
      %44 = sbr.rel (0) target = $region21
    $region20: #{causal_transformer.1} parent=1 // pred_region
      _
    $region21: #{causal_transformer.1} parent=1 // pred_fallthru
      _
    // Predicated region
    $region22: #{causal_transformer.1} parent=1 // pred_check
      _
    $region23: #{causal_transformer.1} parent=1 // pred_check_branch
      %46 = sbr.rel (0) target = $region25
    $region24: #{causal_transformer.1} parent=1 // pred_region
      %s48 = ssub.s32 3072, 3072
      %49 = vsyncadd [#allocation6], %s48
      %s50 = sshll.u32 [#allocation7], 4
      %s51 = int_to_ptr.vmem [resolvable:$true] %s50
      %56 = dma.hbm_to_vmem [thread:$0]  %s5, 3072, %s51, [#allocation6], 384, 384, 24
    $region25: #{causal_transformer.1} parent=1 // pred_fallthru
      _
    // Predicated region
    $region26: #{causal_transformer.1} parent=1 // pred_check
      _
    $region27: #{causal_transformer.1} parent=1 // pred_check_branch
      %58 = sbr.rel (0) target = $region29
    $region28: #{causal_transformer.1} parent=1 // pred_region
      %s60 = ssub.s32 4096, 4096
      %61 = vsyncadd [#allocation9], %s60
      %s62 = sshll.u32 [#allocation8], 4
      %s63 = int_to_ptr.vmem [resolvable:$true] %s62
      %68 = dma.hbm_to_vmem [thread:$0]  %s6, 4096, %s63, [#allocation9], 128, 128, 8
    $region29: #{causal_transformer.1} parent=1 // pred_fallthru
      _
    // Predicated region
    $region30: #{causal_transformer.1} parent=1 // pred_check
      _
    $region31: #{causal_transformer.1} parent=1 // pred_check_branch
      %70 = sbr.rel (0) target = $region33
    $region32: #{causal_transformer.1} parent=1 // pred_region
      _
    $region33: #{causal_transformer.1} parent=1 // pred_fallthru
      _
    // Predicated region
    $region34: #{causal_transformer.1} parent=1 // pred_check
      _
    $region35: #{causal_transformer.1} parent=1 // pred_check_branch
      %72 = sbr.rel (0) target = $region37
    $region36: #{causal_transformer.1} parent=1 // pred_region
      %s74 = ssub.s32 512, 512
      %75 = vsyncadd [#allocation9], %s74
      %s76 = sshll.u32 [#allocation10], 4
      %s77 = int_to_ptr.vmem [resolvable:$true] %s76
      %82 = dma.hbm_to_vmem [thread:$0]  %s8, 512, %s77, [#allocation9], 128, 128, 8
    $region37: #{causal_transformer.1} parent=1 // pred_fallthru
      _
    // Predicated region
    $region38: #{causal_transformer.1} parent=1 // pred_check
      _
    $region39: #{causal_transformer.1} parent=1 // pred_check_branch
      %84 = sbr.rel (0) target = $region41
    $region40: #{causal_transformer.1} parent=1 // pred_region
      _
    $region41: #{causal_transformer.1} parent=1 // pred_fallthru
      _
    // Predicated region
    $region42: #{causal_transformer.1} parent=1 // pred_check
      _
    $region43: #{causal_transformer.1} parent=1 // pred_check_branch
      %86 = sbr.rel (0) target = $region45
    $region44: #{causal_transformer.1} parent=1 // pred_region
      %87 = dma.done [#allocation3], 128
    $region45: #{causal_transformer.1} parent=1 // pred_fallthru
      _
    // Predicated region
    $region46: #{causal_transformer.1} parent=1 // pred_check
      _
    $region47: #{causal_transformer.1} parent=1 // pred_check_branch
      %89 = sbr.rel (0) target = $region49
    $region48: #{causal_transformer.1} parent=1 // pred_region
      %90 = dma.done [#allocation6], 128
    $region49: #{causal_transformer.1} parent=1 // pred_fallthru
      _
    // Predicated region
    $region50: #{causal_transformer.1} parent=1 // pred_check
      _
    $region51: #{causal_transformer.1} parent=1 // pred_check_branch
      %92 = sbr.rel (0) target = $region53
    $region52: #{causal_transformer.1} parent=1 // pred_region
      %93 = dma.done [#allocation6], 3072
    $region53: #{causal_transformer.1} parent=1 // pred_fallthru
      _
    // Predicated region
    $region54: #{causal_transformer.1} parent=1 // pred_check
      _
    $region55: #{causal_transformer.1} parent=1 // pred_check_branch
      %95 = sbr.rel (0) target = $region57
    $region56: #{causal_transformer.1} parent=1 // pred_region
      %96 = dma.done [#allocation9], 4096
    $region57: #{causal_transformer.1} parent=1 // pred_fallthru
      _
    // Predicated region
    $region58: #{causal_transformer.1} parent=1 // pred_check
      _
    $region59: #{causal_transformer.1} parent=1 // pred_check_branch
      %98 = sbr.rel (0) target = $region61
    $region60: #{causal_transformer.1} parent=1 // pred_region
      %99 = dma.done [#allocation9], 512
    $region61: #{causal_transformer.1} parent=1 // pred_fallthru
      _
    %v100 = vld [vmem:[#allocation2] sm:$0xff]
    %v101 = vld [vmem:[%s1] sm:$0xff]
    %v102 = vadd.f32 %v100, %v101
    %v103 = vld [vmem:[#allocation5] sm:$0xff]
    %v104 = vld [vmem:[%s3] sm:$0xff]
    %v105 = vld [vmem:[%s3 + $0x8] sm:$0xff]
    %v106 = vld [vmem:[%s3 + $0x10] sm:$0xff]
    %v107 = vld [vmem:[%s3 + $0x18] sm:$0xff]
    %v108 = vld [vmem:[%s4] sm:$0xff]
    %v109 = vld [vmem:[%s4 + $0x8] sm:$0xff]
    %v110 = vld [vmem:[%s4 + $0x10] sm:$0xff]
    %v111 = vld [vmem:[%s4 + $0x18] sm:$0xff]
    %v112 = vld [vmem:[%s7] sm:$0xff]
    %v113 = vld [vmem:[%s7 + $0x8] sm:$0xff]
    %v114 = vld [vmem:[%s7 + $0x10] sm:$0xff]
    %v115 = vld [vmem:[#allocation8] sm:$0xff]
    %v116 = vld [vmem:[#allocation8 + $0x8] sm:$0xff]
    %v117 = vld [vmem:[#allocation8 + $0x10] sm:$0xff]
    %v118 = vld [vmem:[#allocation8 + $0x18] sm:$0xff]
    %v119 = vld [vmem:[#allocation8 + $0x20] sm:$0xff]
    %v120 = vld [vmem:[#allocation8 + $0x28] sm:$0xff]
    %v121 = vld [vmem:[#allocation8 + $0x30] sm:$0xff]
    %v122 = vld [vmem:[#allocation8 + $0x38] sm:$0xff]
    %v123 = vld [vmem:[#allocation8 + $0x40] sm:$0xff]
    %v124 = vld [vmem:[#allocation8 + $0x48] sm:$0xff]
    %v125 = vld [vmem:[#allocation8 + $0x50] sm:$0xff]
    %v126 = vld [vmem:[#allocation8 + $0x58] sm:$0xff]
    %v127 = vld [vmem:[#allocation8 + $0x60] sm:$0xff]
    %v128 = vld [vmem:[#allocation8 + $0x68] sm:$0xff]
    %v129 = vld [vmem:[#allocation8 + $0x70] sm:$0xff]
    %v130 = vld [vmem:[#allocation8 + $0x78] sm:$0xff]
    %v131 = vld [vmem:[#allocation7] sm:$0xff]
    %v132 = vld [vmem:[#allocation7 + $0x8] sm:$0xff]
    %v133 = vld [vmem:[#allocation7 + $0x10] sm:$0xff]
    %v134 = vld [vmem:[#allocation7 + $0x18] sm:$0xff]
    %v135 = vld [vmem:[#allocation7 + $0x20] sm:$0xff]
    %v136 = vld [vmem:[#allocation7 + $0x28] sm:$0xff]
    %v137 = vld [vmem:[#allocation7 + $0x30] sm:$0xff]
    %v138 = vld [vmem:[#allocation7 + $0x38] sm:$0xff]
    %v139 = vld [vmem:[#allocation7 + $0x40] sm:$0xff]
    %v140 = vld [vmem:[#allocation7 + $0x48] sm:$0xff]
    %v141 = vld [vmem:[#allocation7 + $0x50] sm:$0xff]
    %v142 = vld [vmem:[#allocation7 + $0x58] sm:$0xff]
    %v143 = vlaneseq
    %v144 = vshrl.u32 %v143, 7
    %v145 = vsub.s32 0, %v144
    %v146 = vrot.slane %v112, %v145
    %v147 = vlaneseq
    %v148 = vshrl.u32 %v147, 7
    %v149 = vsub.s32 0, %v148
    %v150 = vrot.slane %v113, %v149
    %v151 = vlaneseq
    %v152 = vshrl.u32 %v151, 7
    %v153 = vsub.s32 0, %v152
    %v154 = vrot.slane %v114, %v153
    %vm155 = vcmask 261120
    %v157 = vsel %vm155, %v102, 0
    %159 = vmatprep.subr.mxu0 0.0
    %160 = vmatpush1.msra.mxu0 0.0
    %161 = vmatprep.subr.mxu0 0.0
    %162 = vmatpush1.msra.mxu0 0.0
    %163 = vmatprep.subr.mxu0 0.0
    %164 = vmatpush1.msra.mxu0 0.0
    %165 = vmatprep.subr.mxu0 0.0
    %166 = vmatpush1.msra.mxu0 0.0
    %167 = vmatprep.subr.mxu0 0.0
    %168 = vmatpush1.msra.mxu0 0.0
    %169 = vmatprep.subr.mxu0 0.0
    %170 = vmatpush1.msra.mxu0 0.0
    %171 = vmatprep.subr.mxu0 0.0
    %172 = vmatpush1.msra.mxu0 0.0
    %173 = vmatprep.subr.mxu0 0.0
    %174 = vmatpush1.msra.mxu0 0.0
    %175 = vmatprep.subr.mxu0 0.0
    %176 = vmatpush1.msra.mxu0 0.0
    %177 = vmatprep.subr.mxu0 0.0
    %178 = vmatpush1.msra.mxu0 0.0
    %179 = vmatprep.subr.mxu0 0.0
    %180 = vmatpush1.msra.mxu0 0.0
    %181 = vmatprep.subr.mxu0 0.0
    %182 = vmatpush1.msra.mxu0 0.0
    %183 = vmatprep.subr.mxu0 %v141
    %184 = vmatpush1.msra.mxu0 %v140
    %185 = vmatprep.subr.mxu0 %v138
    %186 = vmatpush1.msra.mxu0 %v137
    %187 = vmatprep.subr.mxu0 %v135
    %188 = vmatpush1.msra.mxu0 %v134
    %189 = vmatprep.subr.mxu0 %v132
    %190 = vmatpush1.msra.mxu0 %v131
    %191 = vmatprep.subr.mxu0 0.0
    %192 = vmatpush2.msra.mxu0 0.0
    %193 = vmatprep.subr.mxu0 0.0
    %194 = vmatpush2.msra.mxu0 0.0
    %195 = vmatprep.subr.mxu0 0.0
    %196 = vmatpush2.msra.mxu0 0.0
    %197 = vmatprep.subr.mxu0 0.0
    %198 = vmatpush2.msra.mxu0 0.0
    %199 = vmatprep.subr.mxu0 0.0
    %200 = vmatpush2.msra.mxu0 0.0
    %201 = vmatprep.subr.mxu0 0.0
    %202 = vmatpush2.msra.mxu0 0.0
    %203 = vmatprep.subr.mxu0 0.0
    %204 = vmatpush2.msra.mxu0 0.0
    %205 = vmatprep.subr.mxu0 0.0
    %206 = vmatpush2.msra.mxu0 0.0
    %207 = vmatprep.subr.mxu0 0.0
    %208 = vmatpush2.msra.mxu0 0.0
    %209 = vmatprep.subr.mxu0 0.0
    %210 = vmatpush2.msra.mxu0 0.0
    %211 = vmatprep.subr.mxu0 0.0
    %212 = vmatpush2.msra.mxu0 0.0
    %213 = vmatprep.subr.mxu0 0.0
    %214 = vmatpush2.msra.mxu0 0.0
    %215 = vmatprep.subr.mxu0 0.0
    %216 = vmatpush2.msra.mxu0 0.0
    %217 = vmatprep.subr.mxu0 0.0
    %218 = vmatpush2.msra.mxu0 0.0
    %219 = vmatprep.subr.mxu0 0.0
    %220 = vmatpush2.msra.mxu0 0.0
    %221 = vmatprep.subr.mxu0 0.0
    %222 = vmatpush2.msra.mxu0 0.0
    %223 = vmatprep.mubr.f32.mxu0 0.0
    %224 = vmatmul.mubr.f32.gmra.mxu0 %v157
    %v225 = vpop.f32.mrf.mxu0
    %v226 = vadd.f32 %v146, %v225
    %v227 = vpop.f32.mrf.mxu0
    %v228 = vadd.f32 %v150, %v227
    %229 = vdwg.mxu0
    %230 = vmatprep.subr.mxu0 0.0
    %231 = vmatpush1.msra.mxu0 0.0
    %232 = vmatprep.subr.mxu0 0.0
    %233 = vmatpush1.msra.mxu0 0.0
    %234 = vmatprep.subr.mxu0 0.0
    %235 = vmatpush1.msra.mxu0 0.0
    %236 = vmatprep.subr.mxu0 0.0
    %237 = vmatpush1.msra.mxu0 0.0
    %238 = vmatprep.subr.mxu0 0.0
    %239 = vmatpush1.msra.mxu0 0.0
    %240 = vmatprep.subr.mxu0 0.0
    %241 = vmatpush1.msra.mxu0 0.0
    %242 = vmatprep.subr.mxu0 0.0
    %243 = vmatpush1.msra.mxu0 0.0
    %244 = vmatprep.subr.mxu0 0.0
    %245 = vmatpush1.msra.mxu0 0.0
    %246 = vmatprep.subr.mxu0 0.0
    %247 = vmatpush1.msra.mxu0 0.0
    %248 = vmatprep.subr.mxu0 0.0
    %249 = vmatpush1.msra.mxu0 0.0
    %250 = vmatprep.subr.mxu0 0.0
    %251 = vmatpush1.msra.mxu0 0.0
    %252 = vmatprep.subr.mxu0 0.0
    %253 = vmatpush1.msra.mxu0 0.0
    %254 = vmatprep.subr.mxu0 0.0
    %255 = vmatpush1.msra.mxu0 %v142
    %256 = vmatprep.subr.mxu0 0.0
    %257 = vmatpush1.msra.mxu0 %v139
    %258 = vmatprep.subr.mxu0 0.0
    %259 = vmatpush1.msra.mxu0 %v136
    %260 = vmatprep.subr.mxu0 0.0
    %261 = vmatpush1.msra.mxu0 %v133
    %262 = vmatprep.subr.mxu0 0.0
    %263 = vmatpush2.msra.mxu0 0.0
    %264 = vmatprep.subr.mxu0 0.0
    %265 = vmatpush2.msra.mxu0 0.0
    %266 = vmatprep.subr.mxu0 0.0
    %267 = vmatpush2.msra.mxu0 0.0
    %268 = vmatprep.subr.mxu0 0.0
    %269 = vmatpush2.msra.mxu0 0.0
    %270 = vmatprep.subr.mxu0 0.0
    %271 = vmatpush2.msra.mxu0 0.0
    %272 = vmatprep.subr.mxu0 0.0
    %273 = vmatpush2.msra.mxu0 0.0
    %274 = vmatprep.subr.mxu0 0.0
    %275 = vmatpush2.msra.mxu0 0.0
    %276 = vmatprep.subr.mxu0 0.0
    %277 = vmatpush2.msra.mxu0 0.0
    %278 = vmatprep.subr.mxu0 0.0
    %279 = vmatpush2.msra.mxu0 0.0
    %280 = vmatprep.subr.mxu0 0.0
    %281 = vmatpush2.msra.mxu0 0.0
    %282 = vmatprep.subr.mxu0 0.0
    %283 = vmatpush2.msra.mxu0 0.0
    %284 = vmatprep.subr.mxu0 0.0
    %285 = vmatpush2.msra.mxu0 0.0
    %286 = vmatprep.subr.mxu0 0.0
    %287 = vmatpush2.msra.mxu0 0.0
    %288 = vmatprep.subr.mxu0 0.0
    %289 = vmatpush2.msra.mxu0 0.0
    %290 = vmatprep.subr.mxu0 0.0
    %291 = vmatpush2.msra.mxu0 0.0
    %292 = vmatprep.subr.mxu0 0.0
    %293 = vmatpush2.msra.mxu0 0.0
    %294 = vmatprep.mubr.f32.mxu0 0.0
    %295 = vmatmul.mubr.f32.gmra.mxu0 %v157
    %v296 = vpop.f32.mrf.mxu0
    %v297 = vadd.f32 %v154, %v296
    %v298 = vpop.f32.mrf.mxu0
    %299 = vdwg.mxu0
    %v300 = vmul.f32 %v104, %v228
    %v301 = vmul.f32 %v105, %v228
    %v302 = vmul.f32 %v106, %v228
    %v303 = vmul.f32 %v107, %v228
    %v304 = vmul.f32 %v104, %v297
    %v305 = vmul.f32 %v105, %v297
    %v306 = vmul.f32 %v106, %v297
    %v307 = vmul.f32 %v107, %v297
    %v309 = vsel %vm155, %v226, 0
    %v312 = vsel %vm155, %v300, 0
    %v315 = vsel %vm155, %v301, 0
    %v318 = vsel %vm155, %v302, 0
    %v321 = vsel %vm155, %v303, 0
    %323 = vmatprep.subr.mxu0 0.0
    %324 = vmatpush1.xpose.msra.mxu0 0.0
    %325 = vmatprep.subr.mxu0 0.0
    %326 = vmatpush1.xpose.msra.mxu0 0.0
    %327 = vmatprep.subr.mxu0 0.0
    %328 = vmatpush1.xpose.msra.mxu0 0.0
    %329 = vmatprep.subr.mxu0 0.0
    %330 = vmatpush1.xpose.msra.mxu0 0.0
    %331 = vmatprep.subr.mxu0 0.0
    %332 = vmatpush1.xpose.msra.mxu0 0.0
    %333 = vmatprep.subr.mxu0 0.0
    %334 = vmatpush1.xpose.msra.mxu0 0.0
    %335 = vmatprep.subr.mxu0 0.0
    %336 = vmatpush1.xpose.msra.mxu0 0.0
    %337 = vmatprep.subr.mxu0 0.0
    %338 = vmatpush1.xpose.msra.mxu0 0.0
    %339 = vmatprep.subr.mxu0 0.0
    %340 = vmatpush1.xpose.msra.mxu0 0.0
    %341 = vmatprep.subr.mxu0 0.0
    %342 = vmatpush1.xpose.msra.mxu0 0.0
    %343 = vmatprep.subr.mxu0 0.0
    %344 = vmatpush1.xpose.msra.mxu0 0.0
    %345 = vmatprep.subr.mxu0 0.0
    %346 = vmatpush1.xpose.msra.mxu0 0.0
    %347 = vmatprep.subr.mxu0 0.0
    %348 = vmatpush1.xpose.msra.mxu0 %v321
    %349 = vmatprep.subr.mxu0 0.0
    %350 = vmatpush1.xpose.msra.mxu0 %v318
    %351 = vmatprep.subr.mxu0 0.0
    %352 = vmatpush1.xpose.msra.mxu0 %v315
    %353 = vmatprep.subr.mxu0 0.0
    %354 = vmatpush1.xpose.msra.mxu0 %v312
    %355 = vmatprep.subr.mxu0 0.0
    %356 = vmatpush2.xpose.msra.mxu0 0.0
    %357 = vmatprep.subr.mxu0 0.0
    %358 = vmatpush2.xpose.msra.mxu0 0.0
    %359 = vmatprep.subr.mxu0 0.0
    %360 = vmatpush2.xpose.msra.mxu0 0.0
    %361 = vmatprep.subr.mxu0 0.0
    %362 = vmatpush2.xpose.msra.mxu0 0.0
    %363 = vmatprep.subr.mxu0 0.0
    %364 = vmatpush2.xpose.msra.mxu0 0.0
    %365 = vmatprep.subr.mxu0 0.0
    %366 = vmatpush2.xpose.msra.mxu0 0.0
    %367 = vmatprep.subr.mxu0 0.0
    %368 = vmatpush2.xpose.msra.mxu0 0.0
    %369 = vmatprep.subr.mxu0 0.0
    %370 = vmatpush2.xpose.msra.mxu0 0.0
    %371 = vmatprep.subr.mxu0 0.0
    %372 = vmatpush2.xpose.msra.mxu0 0.0
    %373 = vmatprep.subr.mxu0 0.0
    %374 = vmatpush2.xpose.msra.mxu0 0.0
    %375 = vmatprep.subr.mxu0 0.0
    %376 = vmatpush2.xpose.msra.mxu0 0.0
    %377 = vmatprep.subr.mxu0 0.0
    %378 = vmatpush2.xpose.msra.mxu0 0.0
    %379 = vmatprep.subr.mxu0 0.0
    %380 = vmatpush2.xpose.msra.mxu0 0.0
    %381 = vmatprep.subr.mxu0 0.0
    %382 = vmatpush2.xpose.msra.mxu0 0.0
    %383 = vmatprep.subr.mxu0 0.0
    %384 = vmatpush2.xpose.msra.mxu0 0.0
    %385 = vmatprep.subr.mxu0 0.0
    %386 = vmatpush2.xpose.msra.mxu0 0.0
    %387 = vmatprep.mubr.f32.mxu0 0.0
    %388 = vmatmul.mubr.f32.gmra.mxu0 %v309
    %v389 = vpop.f32.mrf.mxu0
    %v390 = vadd.f32 %v103, %v389
    %v391 = vpop.f32.mrf.mxu0
    %392 = vdwg.mxu0
    %v393 = vsel %vm155, %v390, -inf
    %394 = vmax.xlane.f32.xlu0 %v393
    %v395 = vpop.xlane.xlu0 %394
    %v396 = vsub.f32 %v390, %v395
    %v397 = vmul.f32 %v396, 1.442695
    %v398 = vpow.pop %v397
    %v400 = vsel %vm155, %v398, 0
    %402 = vmatprep.subr.mxu0 0.0
    %403 = vmatpush1.msra.mxu0 0.0
    %404 = vmatprep.subr.mxu0 0.0
    %405 = vmatpush1.msra.mxu0 0.0
    %406 = vmatprep.subr.mxu0 0.0
    %407 = vmatpush1.msra.mxu0 0.0
    %408 = vmatprep.subr.mxu0 0.0
    %409 = vmatpush1.msra.mxu0 0.0
    %410 = vmatprep.subr.mxu0 0.0
    %411 = vmatpush1.msra.mxu0 0.0
    %412 = vmatprep.subr.mxu0 0.0
    %413 = vmatpush1.msra.mxu0 0.0
    %414 = vmatprep.subr.mxu0 0.0
    %415 = vmatpush1.msra.mxu0 0.0
    %416 = vmatprep.subr.mxu0 0.0
    %417 = vmatpush1.msra.mxu0 0.0
    %418 = vmatprep.subr.mxu0 0.0
    %419 = vmatpush1.msra.mxu0 0.0
    %420 = vmatprep.subr.mxu0 0.0
    %421 = vmatpush1.msra.mxu0 0.0
    %422 = vmatprep.subr.mxu0 0.0
    %423 = vmatpush1.msra.mxu0 0.0
    %424 = vmatprep.subr.mxu0 0.0
    %425 = vmatpush1.msra.mxu0 0.0
    %426 = vmatprep.subr.mxu0 %v307
    %427 = vmatpush1.msra.mxu0 %v111
    %428 = vmatprep.subr.mxu0 %v306
    %429 = vmatpush1.msra.mxu0 %v110
    %430 = vmatprep.subr.mxu0 %v305
    %431 = vmatpush1.msra.mxu0 %v109
    %432 = vmatprep.subr.mxu0 %v304
    %433 = vmatpush1.msra.mxu0 %v108
    %434 = vmatprep.subr.mxu0 0.0
    %435 = vmatpush2.msra.mxu0 0.0
    %436 = vmatprep.subr.mxu0 0.0
    %437 = vmatpush2.msra.mxu0 0.0
    %438 = vmatprep.subr.mxu0 0.0
    %439 = vmatpush2.msra.mxu0 0.0
    %440 = vmatprep.subr.mxu0 0.0
    %441 = vmatpush2.msra.mxu0 0.0
    %442 = vmatprep.subr.mxu0 0.0
    %443 = vmatpush2.msra.mxu0 0.0
    %444 = vmatprep.subr.mxu0 0.0
    %445 = vmatpush2.msra.mxu0 0.0
    %446 = vmatprep.subr.mxu0 0.0
    %447 = vmatpush2.msra.mxu0 0.0
    %448 = vmatprep.subr.mxu0 0.0
    %449 = vmatpush2.msra.mxu0 0.0
    %450 = vmatprep.subr.mxu0 0.0
    %451 = vmatpush2.msra.mxu0 0.0
    %452 = vmatprep.subr.mxu0 0.0
    %453 = vmatpush2.msra.mxu0 0.0
    %454 = vmatprep.subr.mxu0 0.0
    %455 = vmatpush2.msra.mxu0 0.0
    %456 = vmatprep.subr.mxu0 0.0
    %457 = vmatpush2.msra.mxu0 0.0
    %458 = vmatprep.subr.mxu0 0.0
    %459 = vmatpush2.msra.mxu0 0.0
    %460 = vmatprep.subr.mxu0 0.0
    %461 = vmatpush2.msra.mxu0 0.0
    %462 = vmatprep.subr.mxu0 0.0
    %463 = vmatpush2.msra.mxu0 0.0
    %464 = vmatprep.subr.mxu0 0.0
    %465 = vmatpush2.msra.mxu0 0.0
    %466 = vmatprep.mubr.f32.mxu0 0.0
    %467 = vmatmul.mubr.f32.gmra.mxu0 %v400
    %v468 = vpop.f32.mrf.mxu0
    %v469 = vadd.f32 0.0, %v468
    %v470 = vpop.f32.mrf.mxu0
    %v471 = vadd.f32 0.0, %v470
    %472 = vdwg.mxu0
    %v473 = vrcp.pop %v469
    %v474 = vmul.f32 %v471, %v473
    %v475 = vlaneseq
    %v476 = vshrl.u32 %v475, 7
    %v477 = vsub.s32 1, %v476
    %v478 = vrot.slane %v112, %v477
    %v480 = vsel %vm155, %v474, 0
    %482 = vmatprep.subr.mxu0 0.0
    %483 = vmatpush1.msra.mxu0 0.0
    %484 = vmatprep.subr.mxu0 0.0
    %485 = vmatpush1.msra.mxu0 0.0
    %486 = vmatprep.subr.mxu0 0.0
    %487 = vmatpush1.msra.mxu0 0.0
    %488 = vmatprep.subr.mxu0 0.0
    %489 = vmatpush1.msra.mxu0 0.0
    %490 = vmatprep.subr.mxu0 0.0
    %491 = vmatpush1.msra.mxu0 0.0
    %492 = vmatprep.subr.mxu0 0.0
    %493 = vmatpush1.msra.mxu0 0.0
    %494 = vmatprep.subr.mxu0 0.0
    %495 = vmatpush1.msra.mxu0 0.0
    %496 = vmatprep.subr.mxu0 0.0
    %497 = vmatpush1.msra.mxu0 0.0
    %498 = vmatprep.subr.mxu0 0.0
    %499 = vmatpush1.msra.mxu0 0.0
    %500 = vmatprep.subr.mxu0 0.0
    %501 = vmatpush1.msra.mxu0 0.0
    %502 = vmatprep.subr.mxu0 0.0
    %503 = vmatpush1.msra.mxu0 0.0
    %504 = vmatprep.subr.mxu0 0.0
    %505 = vmatpush1.msra.mxu0 0.0
    %506 = vmatprep.subr.mxu0 0.0
    %507 = vmatpush1.msra.mxu0 %v118
    %508 = vmatprep.subr.mxu0 0.0
    %509 = vmatpush1.msra.mxu0 %v117
    %510 = vmatprep.subr.mxu0 0.0
    %511 = vmatpush1.msra.mxu0 %v116
    %512 = vmatprep.subr.mxu0 0.0
    %513 = vmatpush1.msra.mxu0 %v115
    %514 = vmatprep.subr.mxu0 0.0
    %515 = vmatpush2.msra.mxu0 0.0
    %516 = vmatprep.subr.mxu0 0.0
    %517 = vmatpush2.msra.mxu0 0.0
    %518 = vmatprep.subr.mxu0 0.0
    %519 = vmatpush2.msra.mxu0 0.0
    %520 = vmatprep.subr.mxu0 0.0
    %521 = vmatpush2.msra.mxu0 0.0
    %522 = vmatprep.subr.mxu0 0.0
    %523 = vmatpush2.msra.mxu0 0.0
    %524 = vmatprep.subr.mxu0 0.0
    %525 = vmatpush2.msra.mxu0 0.0
    %526 = vmatprep.subr.mxu0 0.0
    %527 = vmatpush2.msra.mxu0 0.0
    %528 = vmatprep.subr.mxu0 0.0
    %529 = vmatpush2.msra.mxu0 0.0
    %530 = vmatprep.subr.mxu0 0.0
    %531 = vmatpush2.msra.mxu0 0.0
    %532 = vmatprep.subr.mxu0 0.0
    %533 = vmatpush2.msra.mxu0 0.0
    %534 = vmatprep.subr.mxu0 0.0
    %535 = vmatpush2.msra.mxu0 0.0
    %536 = vmatprep.subr.mxu0 0.0
    %537 = vmatpush2.msra.mxu0 0.0
    %538 = vmatprep.subr.mxu0 0.0
    %539 = vmatpush2.msra.mxu0 0.0
    %540 = vmatprep.subr.mxu0 0.0
    %541 = vmatpush2.msra.mxu0 0.0
    %542 = vmatprep.subr.mxu0 0.0
    %543 = vmatpush2.msra.mxu0 0.0
    %544 = vmatprep.subr.mxu0 0.0
    %545 = vmatpush2.msra.mxu0 0.0
    %546 = vmatprep.mubr.f32.mxu0 0.0
    %547 = vmatmul.mubr.f32.gmra.mxu0 %v480
    %v548 = vpop.f32.mrf.mxu0
    %v549 = vadd.f32 %v478, %v548
    %v550 = vpop.f32.mrf.mxu0
    %551 = vdwg.mxu0
    %v552 = vadd.f32 %v102, %v549
    %v553 = vsel %vm155, %v552, 0.0
    %554 = vadd.xlane.f32.xlu0 %v553
    %v555 = vpop.xlane.xlu0 %554
    %v556 = vrcp.pop 32.0
    %v557 = vmul.f32 %v555, %v556
    %v558 = vmul.f32 %v552, %v552
    %v559 = vsel %vm155, %v558, 0.0
    %560 = vadd.xlane.f32.xlu0 %v559
    %v561 = vpop.xlane.xlu0 %560
    %v562 = vmul.f32 %v561, %v556
    %v563 = vmul.f32 %v557, %v557
    %v564 = vsub.f32 %v562, %v563
    %v565 = vsub.f32 %v552, %v557
    %v566 = vadd.f32 %v564, 1e-05
    %v567 = vrsqrt.pop %v566
    %v568 = vmul.f32 %v565, %v567
    %v569 = vlaneseq
    %v570 = vshrl.u32 %v569, 7
    %v571 = vsub.s32 4, %v570
    %v572 = vrot.slane %v112, %v571
    %v573 = vmul.f32 %v568, %v572
    %v574 = vlaneseq
    %v575 = vshrl.u32 %v574, 7
    %v576 = vsub.s32 5, %v575
    %v577 = vrot.slane %v112, %v576
    %v578 = vadd.f32 %v573, %v577
    %v579 = vlaneseq
    %v580 = vshrl.u32 %v579, 7
    %v581 = vsub.s32 2, %v580
    %v582 = vrot.slane %v112, %v581
    %v584 = vsel %vm155, %v578, 0
    %586 = vmatprep.subr.mxu0 0.0
    %587 = vmatpush1.msra.mxu0 0.0
    %588 = vmatprep.subr.mxu0 0.0
    %589 = vmatpush1.msra.mxu0 0.0
    %590 = vmatprep.subr.mxu0 0.0
    %591 = vmatpush1.msra.mxu0 0.0
    %592 = vmatprep.subr.mxu0 0.0
    %593 = vmatpush1.msra.mxu0 0.0
    %594 = vmatprep.subr.mxu0 0.0
    %595 = vmatpush1.msra.mxu0 0.0
    %596 = vmatprep.subr.mxu0 0.0
    %597 = vmatpush1.msra.mxu0 0.0
    %598 = vmatprep.subr.mxu0 0.0
    %599 = vmatpush1.msra.mxu0 0.0
    %600 = vmatprep.subr.mxu0 0.0
    %601 = vmatpush1.msra.mxu0 0.0
    %602 = vmatprep.subr.mxu0 0.0
    %603 = vmatpush1.msra.mxu0 0.0
    %604 = vmatprep.subr.mxu0 0.0
    %605 = vmatpush1.msra.mxu0 0.0
    %606 = vmatprep.subr.mxu0 0.0
    %607 = vmatpush1.msra.mxu0 0.0
    %608 = vmatprep.subr.mxu0 0.0
    %609 = vmatpush1.msra.mxu0 0.0
    %610 = vmatprep.subr.mxu0 0.0
    %611 = vmatpush1.msra.mxu0 %v122
    %612 = vmatprep.subr.mxu0 0.0
    %613 = vmatpush1.msra.mxu0 %v121
    %614 = vmatprep.subr.mxu0 0.0
    %615 = vmatpush1.msra.mxu0 %v120
    %616 = vmatprep.subr.mxu0 0.0
    %617 = vmatpush1.msra.mxu0 %v119
    %618 = vmatprep.subr.mxu0 0.0
    %619 = vmatpush2.msra.mxu0 0.0
    %620 = vmatprep.subr.mxu0 0.0
    %621 = vmatpush2.msra.mxu0 0.0
    %622 = vmatprep.subr.mxu0 0.0
    %623 = vmatpush2.msra.mxu0 0.0
    %624 = vmatprep.subr.mxu0 0.0
    %625 = vmatpush2.msra.mxu0 0.0
    %626 = vmatprep.subr.mxu0 0.0
    %627 = vmatpush2.msra.mxu0 0.0
    %628 = vmatprep.subr.mxu0 0.0
    %629 = vmatpush2.msra.mxu0 0.0
    %630 = vmatprep.subr.mxu0 0.0
    %631 = vmatpush2.msra.mxu0 0.0
    %632 = vmatprep.subr.mxu0 0.0
    %633 = vmatpush2.msra.mxu0 0.0
    %634 = vmatprep.subr.mxu0 0.0
    %635 = vmatpush2.msra.mxu0 0.0
    %636 = vmatprep.subr.mxu0 0.0
    %637 = vmatpush2.msra.mxu0 0.0
    %638 = vmatprep.subr.mxu0 0.0
    %639 = vmatpush2.msra.mxu0 0.0
    %640 = vmatprep.subr.mxu0 0.0
    %641 = vmatpush2.msra.mxu0 0.0
    %642 = vmatprep.subr.mxu0 0.0
    %643 = vmatpush2.msra.mxu0 0.0
    %644 = vmatprep.subr.mxu0 0.0
    %645 = vmatpush2.msra.mxu0 0.0
    %646 = vmatprep.subr.mxu0 0.0
    %647 = vmatpush2.msra.mxu0 0.0
    %648 = vmatprep.subr.mxu0 0.0
    %649 = vmatpush2.msra.mxu0 0.0
    %650 = vmatprep.mubr.f32.mxu0 0.0
    %651 = vmatmul.mubr.f32.gmra.mxu0 %v584
    %v652 = vpop.f32.mrf.mxu0
    %v653 = vadd.f32 %v582, %v652
    %v654 = vpop.f32.mrf.mxu0
    %655 = vdwg.mxu0
    %v656 = vmax.f32 %v653, 0.0
    %v657 = vlaneseq
    %v658 = vshrl.u32 %v657, 7
    %v659 = vsub.s32 3, %v658
    %v660 = vrot.slane %v112, %v659
    %vm661 = vcmask 523264
    %v663 = vsel %vm661, %v656, 0
    %665 = vmatprep.subr.mxu0 0.0
    %666 = vmatpush1.msra.mxu0 0.0
    %667 = vmatprep.subr.mxu0 0.0
    %668 = vmatpush1.msra.mxu0 0.0
    %669 = vmatprep.subr.mxu0 0.0
    %670 = vmatpush1.msra.mxu0 0.0
    %671 = vmatprep.subr.mxu0 0.0
    %672 = vmatpush1.msra.mxu0 0.0
    %673 = vmatprep.subr.mxu0 0.0
    %674 = vmatpush1.msra.mxu0 0.0
    %675 = vmatprep.subr.mxu0 0.0
    %676 = vmatpush1.msra.mxu0 0.0
    %677 = vmatprep.subr.mxu0 0.0
    %678 = vmatpush1.msra.mxu0 0.0
    %679 = vmatprep.subr.mxu0 0.0
    %680 = vmatpush1.msra.mxu0 0.0
    %681 = vmatprep.subr.mxu0 0.0
    %682 = vmatpush1.msra.mxu0 %v130
    %683 = vmatprep.subr.mxu0 0.0
    %684 = vmatpush1.msra.mxu0 %v129
    %685 = vmatprep.subr.mxu0 0.0
    %686 = vmatpush1.msra.mxu0 %v128
    %687 = vmatprep.subr.mxu0 0.0
    %688 = vmatpush1.msra.mxu0 %v127
    %689 = vmatprep.subr.mxu0 0.0
    %690 = vmatpush1.msra.mxu0 %v126
    %691 = vmatprep.subr.mxu0 0.0
    %692 = vmatpush1.msra.mxu0 %v125
    %693 = vmatprep.subr.mxu0 0.0
    %694 = vmatpush1.msra.mxu0 %v124
    %695 = vmatprep.subr.mxu0 0.0
    %696 = vmatpush1.msra.mxu0 %v123
    %697 = vmatprep.subr.mxu0 0.0
    %698 = vmatpush2.msra.mxu0 0.0
    %699 = vmatprep.subr.mxu0 0.0
    %700 = vmatpush2.msra.mxu0 0.0
    %701 = vmatprep.subr.mxu0 0.0
    %702 = vmatpush2.msra.mxu0 0.0
    %703 = vmatprep.subr.mxu0 0.0
    %704 = vmatpush2.msra.mxu0 0.0
    %705 = vmatprep.subr.mxu0 0.0
    %706 = vmatpush2.msra.mxu0 0.0
    %707 = vmatprep.subr.mxu0 0.0
    %708 = vmatpush2.msra.mxu0 0.0
    %709 = vmatprep.subr.mxu0 0.0
    %710 = vmatpush2.msra.mxu0 0.0
    %711 = vmatprep.subr.mxu0 0.0
    %712 = vmatpush2.msra.mxu0 0.0
    %713 = vmatprep.subr.mxu0 0.0
    %714 = vmatpush2.msra.mxu0 0.0
    %715 = vmatprep.subr.mxu0 0.0
    %716 = vmatpush2.msra.mxu0 0.0
    %717 = vmatprep.subr.mxu0 0.0
    %718 = vmatpush2.msra.mxu0 0.0
    %719 = vmatprep.subr.mxu0 0.0
    %720 = vmatpush2.msra.mxu0 0.0
    %721 = vmatprep.subr.mxu0 0.0
    %722 = vmatpush2.msra.mxu0 0.0
    %723 = vmatprep.subr.mxu0 0.0
    %724 = vmatpush2.msra.mxu0 0.0
    %725 = vmatprep.subr.mxu0 0.0
    %726 = vmatpush2.msra.mxu0 0.0
    %727 = vmatprep.subr.mxu0 0.0
    %728 = vmatpush2.msra.mxu0 0.0
    %729 = vmatprep.mubr.f32.mxu0 0.0
    %730 = vmatmul.mubr.f32.gmra.mxu0 %v663
    %v731 = vpop.f32.mrf.mxu0
    %v732 = vadd.f32 %v660, %v731
    %v733 = vpop.f32.mrf.mxu0
    %734 = vdwg.mxu0
    %v735 = vadd.f32 %v578, %v732
    %v736 = vsel %vm155, %v735, 0.0
    %737 = vadd.xlane.f32.xlu0 %v736
    %v738 = vpop.xlane.xlu0 %737
    %v739 = vmul.f32 %v738, %v556
    %v740 = vmul.f32 %v735, %v735
    %v741 = vsel %vm155, %v740, 0.0
    %742 = vadd.xlane.f32.xlu0 %v741
    %v743 = vpop.xlane.xlu0 %742
    %v744 = vmul.f32 %v743, %v556
    %v745 = vmul.f32 %v739, %v739
    %v746 = vsub.f32 %v744, %v745
    %v747 = vsub.f32 %v735, %v739
    %v748 = vadd.f32 %v746, 1e-05
    %v749 = vrsqrt.pop %v748
    %v750 = vmul.f32 %v747, %v749
    %v751 = vlaneseq
    %v752 = vshrl.u32 %v751, 7
    %v753 = vsub.s32 6, %v752
    %v754 = vrot.slane %v112, %v753
    %v755 = vmul.f32 %v750, %v754
    %v756 = vlaneseq
    %v757 = vshrl.u32 %v756, 7
    %v758 = vsub.s32 7, %v757
    %v759 = vrot.slane %v112, %v758
    %v760 = vadd.f32 %v755, %v759
    %s761 = scalar_lea.vmem %s7, 24
    %v762 = vld [vmem:[%s761] sm:$0xff]
    %v763 = vld [vmem:[%s761 + $0x8] sm:$0xff]
    %v764 = vld [vmem:[%s761 + $0x10] sm:$0xff]
    %s765 = scalar_lea.vmem [#allocation8], 128
    %v766 = vld [vmem:[%s765] sm:$0xff]
    %v767 = vld [vmem:[%s765 + $0x8] sm:$0xff]
    %v768 = vld [vmem:[%s765 + $0x10] sm:$0xff]
    %v769 = vld [vmem:[%s765 + $0x18] sm:$0xff]
    %v770 = vld [vmem:[%s765 + $0x20] sm:$0xff]
    %v771 = vld [vmem:[%s765 + $0x28] sm:$0xff]
    %v772 = vld [vmem:[%s765 + $0x30] sm:$0xff]
    %v773 = vld [vmem:[%s765 + $0x38] sm:$0xff]
    %v774 = vld [vmem:[%s765 + $0x40] sm:$0xff]
    %v775 = vld [vmem:[%s765 + $0x48] sm:$0xff]
    %v776 = vld [vmem:[%s765 + $0x50] sm:$0xff]
    %v777 = vld [vmem:[%s765 + $0x58] sm:$0xff]
    %v778 = vld [vmem:[%s765 + $0x60] sm:$0xff]
    %v779 = vld [vmem:[%s765 + $0x68] sm:$0xff]
    %v780 = vld [vmem:[%s765 + $0x70] sm:$0xff]
    %v781 = vld [vmem:[%s765 + $0x78] sm:$0xff]
    %s782 = scalar_lea.vmem [#allocation7], 96
    %v783 = vld [vmem:[%s782] sm:$0xff]
    %v784 = vld [vmem:[%s782 + $0x8] sm:$0xff]
    %v785 = vld [vmem:[%s782 + $0x10] sm:$0xff]
    %v786 = vld [vmem:[%s782 + $0x18] sm:$0xff]
    %v787 = vld [vmem:[%s782 + $0x20] sm:$0xff]
    %v788 = vld [vmem:[%s782 + $0x28] sm:$0xff]
    %v789 = vld [vmem:[%s782 + $0x30] sm:$0xff]
    %v790 = vld [vmem:[%s782 + $0x38] sm:$0xff]
    %v791 = vld [vmem:[%s782 + $0x40] sm:$0xff]
    %v792 = vld [vmem:[%s782 + $0x48] sm:$0xff]
    %v793 = vld [vmem:[%s782 + $0x50] sm:$0xff]
    %v794 = vld [vmem:[%s782 + $0x58] sm:$0xff]
    %v795 = vlaneseq
    %v796 = vshrl.u32 %v795, 7
    %v797 = vsub.s32 0, %v796
    %v798 = vrot.slane %v762, %v797
    %v799 = vlaneseq
    %v800 = vshrl.u32 %v799, 7
    %v801 = vsub.s32 0, %v800
    %v802 = vrot.slane %v763, %v801
    %v803 = vlaneseq
    %v804 = vshrl.u32 %v803, 7
    %v805 = vsub.s32 0, %v804
    %v806 = vrot.slane %v764, %v805
    %v808 = vsel %vm155, %v760, 0
    %810 = vmatprep.subr.mxu0 0.0
    %811 = vmatpush1.msra.mxu0 0.0
    %812 = vmatprep.subr.mxu0 0.0
    %813 = vmatpush1.msra.mxu0 0.0
    %814 = vmatprep.subr.mxu0 0.0
    %815 = vmatpush1.msra.mxu0 0.0
    %816 = vmatprep.subr.mxu0 0.0
    %817 = vmatpush1.msra.mxu0 0.0
    %818 = vmatprep.subr.mxu0 0.0
    %819 = vmatpush1.msra.mxu0 0.0
    %820 = vmatprep.subr.mxu0 0.0
    %821 = vmatpush1.msra.mxu0 0.0
    %822 = vmatprep.subr.mxu0 0.0
    %823 = vmatpush1.msra.mxu0 0.0
    %824 = vmatprep.subr.mxu0 0.0
    %825 = vmatpush1.msra.mxu0 0.0
    %826 = vmatprep.subr.mxu0 0.0
    %827 = vmatpush1.msra.mxu0 0.0
    %828 = vmatprep.subr.mxu0 0.0
    %829 = vmatpush1.msra.mxu0 0.0
    %830 = vmatprep.subr.mxu0 0.0
    %831 = vmatpush1.msra.mxu0 0.0
    %832 = vmatprep.subr.mxu0 0.0
    %833 = vmatpush1.msra.mxu0 0.0
    %834 = vmatprep.subr.mxu0 %v793
    %835 = vmatpush1.msra.mxu0 %v792
    %836 = vmatprep.subr.mxu0 %v790
    %837 = vmatpush1.msra.mxu0 %v789
    %838 = vmatprep.subr.mxu0 %v787
    %839 = vmatpush1.msra.mxu0 %v786
    %840 = vmatprep.subr.mxu0 %v784
    %841 = vmatpush1.msra.mxu0 %v783
    %842 = vmatprep.subr.mxu0 0.0
    %843 = vmatpush2.msra.mxu0 0.0
    %844 = vmatprep.subr.mxu0 0.0
    %845 = vmatpush2.msra.mxu0 0.0
    %846 = vmatprep.subr.mxu0 0.0
    %847 = vmatpush2.msra.mxu0 0.0
    %848 = vmatprep.subr.mxu0 0.0
    %849 = vmatpush2.msra.mxu0 0.0
    %850 = vmatprep.subr.mxu0 0.0
    %851 = vmatpush2.msra.mxu0 0.0
    %852 = vmatprep.subr.mxu0 0.0
    %853 = vmatpush2.msra.mxu0 0.0
    %854 = vmatprep.subr.mxu0 0.0
    %855 = vmatpush2.msra.mxu0 0.0
    %856 = vmatprep.subr.mxu0 0.0
    %857 = vmatpush2.msra.mxu0 0.0
    %858 = vmatprep.subr.mxu0 0.0
    %859 = vmatpush2.msra.mxu0 0.0
    %860 = vmatprep.subr.mxu0 0.0
    %861 = vmatpush2.msra.mxu0 0.0
    %862 = vmatprep.subr.mxu0 0.0
    %863 = vmatpush2.msra.mxu0 0.0
    %864 = vmatprep.subr.mxu0 0.0
    %865 = vmatpush2.msra.mxu0 0.0
    %866 = vmatprep.subr.mxu0 0.0
    %867 = vmatpush2.msra.mxu0 0.0
    %868 = vmatprep.subr.mxu0 0.0
    %869 = vmatpush2.msra.mxu0 0.0
    %870 = vmatprep.subr.mxu0 0.0
    %871 = vmatpush2.msra.mxu0 0.0
    %872 = vmatprep.subr.mxu0 0.0
    %873 = vmatpush2.msra.mxu0 0.0
    %874 = vmatprep.mubr.f32.mxu0 0.0
    %875 = vmatmul.mubr.f32.gmra.mxu0 %v808
    %v876 = vpop.f32.mrf.mxu0
    %v877 = vadd.f32 %v798, %v876
    %v878 = vpop.f32.mrf.mxu0
    %v879 = vadd.f32 %v802, %v878
    %880 = vdwg.mxu0
    %881 = vmatprep.subr.mxu0 0.0
    %882 = vmatpush1.msra.mxu0 0.0
    %883 = vmatprep.subr.mxu0 0.0
    %884 = vmatpush1.msra.mxu0 0.0
    %885 = vmatprep.subr.mxu0 0.0
    %886 = vmatpush1.msra.mxu0 0.0
    %887 = vmatprep.subr.mxu0 0.0
    %888 = vmatpush1.msra.mxu0 0.0
    %889 = vmatprep.subr.mxu0 0.0
    %890 = vmatpush1.msra.mxu0 0.0
    %891 = vmatprep.subr.mxu0 0.0
    %892 = vmatpush1.msra.mxu0 0.0
    %893 = vmatprep.subr.mxu0 0.0
    %894 = vmatpush1.msra.mxu0 0.0
    %895 = vmatprep.subr.mxu0 0.0
    %896 = vmatpush1.msra.mxu0 0.0
    %897 = vmatprep.subr.mxu0 0.0
    %898 = vmatpush1.msra.mxu0 0.0
    %899 = vmatprep.subr.mxu0 0.0
    %900 = vmatpush1.msra.mxu0 0.0
    %901 = vmatprep.subr.mxu0 0.0
    %902 = vmatpush1.msra.mxu0 0.0
    %903 = vmatprep.subr.mxu0 0.0
    %904 = vmatpush1.msra.mxu0 0.0
    %905 = vmatprep.subr.mxu0 0.0
    %906 = vmatpush1.msra.mxu0 %v794
    %907 = vmatprep.subr.mxu0 0.0
    %908 = vmatpush1.msra.mxu0 %v791
    %909 = vmatprep.subr.mxu0 0.0
    %910 = vmatpush1.msra.mxu0 %v788
    %911 = vmatprep.subr.mxu0 0.0
    %912 = vmatpush1.msra.mxu0 %v785
    %913 = vmatprep.subr.mxu0 0.0
    %914 = vmatpush2.msra.mxu0 0.0
    %915 = vmatprep.subr.mxu0 0.0
    %916 = vmatpush2.msra.mxu0 0.0
    %917 = vmatprep.subr.mxu0 0.0
    %918 = vmatpush2.msra.mxu0 0.0
    %919 = vmatprep.subr.mxu0 0.0
    %920 = vmatpush2.msra.mxu0 0.0
    %921 = vmatprep.subr.mxu0 0.0
    %922 = vmatpush2.msra.mxu0 0.0
    %923 = vmatprep.subr.mxu0 0.0
    %924 = vmatpush2.msra.mxu0 0.0
    %925 = vmatprep.subr.mxu0 0.0
    %926 = vmatpush2.msra.mxu0 0.0
    %927 = vmatprep.subr.mxu0 0.0
    %928 = vmatpush2.msra.mxu0 0.0
    %929 = vmatprep.subr.mxu0 0.0
    %930 = vmatpush2.msra.mxu0 0.0
    %931 = vmatprep.subr.mxu0 0.0
    %932 = vmatpush2.msra.mxu0 0.0
    %933 = vmatprep.subr.mxu0 0.0
    %934 = vmatpush2.msra.mxu0 0.0
    %935 = vmatprep.subr.mxu0 0.0
    %936 = vmatpush2.msra.mxu0 0.0
    %937 = vmatprep.subr.mxu0 0.0
    %938 = vmatpush2.msra.mxu0 0.0
    %939 = vmatprep.subr.mxu0 0.0
    %940 = vmatpush2.msra.mxu0 0.0
    %941 = vmatprep.subr.mxu0 0.0
    %942 = vmatpush2.msra.mxu0 0.0
    %943 = vmatprep.subr.mxu0 0.0
    %944 = vmatpush2.msra.mxu0 0.0
    %945 = vmatprep.mubr.f32.mxu0 0.0
    %946 = vmatmul.mubr.f32.gmra.mxu0 %v808
    %v947 = vpop.f32.mrf.mxu0
    %v948 = vadd.f32 %v806, %v947
    %v949 = vpop.f32.mrf.mxu0
    %950 = vdwg.mxu0
    %v951 = vmul.f32 %v104, %v879
    %v952 = vmul.f32 %v105, %v879
    %v953 = vmul.f32 %v106, %v879
    %v954 = vmul.f32 %v107, %v879
    %v955 = vmul.f32 %v104, %v948
    %v956 = vmul.f32 %v105, %v948
    %v957 = vmul.f32 %v106, %v948
    %v958 = vmul.f32 %v107, %v948
    %v960 = vsel %vm155, %v877, 0
    %v963 = vsel %vm155, %v951, 0
    %v966 = vsel %vm155, %v952, 0
    %v969 = vsel %vm155, %v953, 0
    %v972 = vsel %vm155, %v954, 0
    %974 = vmatprep.subr.mxu0 0.0
    %975 = vmatpush1.xpose.msra.mxu0 0.0
    %976 = vmatprep.subr.mxu0 0.0
    %977 = vmatpush1.xpose.msra.mxu0 0.0
    %978 = vmatprep.subr.mxu0 0.0
    %979 = vmatpush1.xpose.msra.mxu0 0.0
    %980 = vmatprep.subr.mxu0 0.0
    %981 = vmatpush1.xpose.msra.mxu0 0.0
    %982 = vmatprep.subr.mxu0 0.0
    %983 = vmatpush1.xpose.msra.mxu0 0.0
    %984 = vmatprep.subr.mxu0 0.0
    %985 = vmatpush1.xpose.msra.mxu0 0.0
    %986 = vmatprep.subr.mxu0 0.0
    %987 = vmatpush1.xpose.msra.mxu0 0.0
    %988 = vmatprep.subr.mxu0 0.0
    %989 = vmatpush1.xpose.msra.mxu0 0.0
    %990 = vmatprep.subr.mxu0 0.0
    %991 = vmatpush1.xpose.msra.mxu0 0.0
    %992 = vmatprep.subr.mxu0 0.0
    %993 = vmatpush1.xpose.msra.mxu0 0.0
    %994 = vmatprep.subr.mxu0 0.0
    %995 = vmatpush1.xpose.msra.mxu0 0.0
    %996 = vmatprep.subr.mxu0 0.0
    %997 = vmatpush1.xpose.msra.mxu0 0.0
    %998 = vmatprep.subr.mxu0 0.0
    %999 = vmatpush1.xpose.msra.mxu0 %v972
    %1000 = vmatprep.subr.mxu0 0.0
    %1001 = vmatpush1.xpose.msra.mxu0 %v969
    %1002 = vmatprep.subr.mxu0 0.0
    %1003 = vmatpush1.xpose.msra.mxu0 %v966
    %1004 = vmatprep.subr.mxu0 0.0
    %1005 = vmatpush1.xpose.msra.mxu0 %v963
    %1006 = vmatprep.subr.mxu0 0.0
    %1007 = vmatpush2.xpose.msra.mxu0 0.0
    %1008 = vmatprep.subr.mxu0 0.0
    %1009 = vmatpush2.xpose.msra.mxu0 0.0
    %1010 = vmatprep.subr.mxu0 0.0
    %1011 = vmatpush2.xpose.msra.mxu0 0.0
    %1012 = vmatprep.subr.mxu0 0.0
    %1013 = vmatpush2.xpose.msra.mxu0 0.0
    %1014 = vmatprep.subr.mxu0 0.0
    %1015 = vmatpush2.xpose.msra.mxu0 0.0
    %1016 = vmatprep.subr.mxu0 0.0
    %1017 = vmatpush2.xpose.msra.mxu0 0.0
    %1018 = vmatprep.subr.mxu0 0.0
    %1019 = vmatpush2.xpose.msra.mxu0 0.0
    %1020 = vmatprep.subr.mxu0 0.0
    %1021 = vmatpush2.xpose.msra.mxu0 0.0
    %1022 = vmatprep.subr.mxu0 0.0
    %1023 = vmatpush2.xpose.msra.mxu0 0.0
    %1024 = vmatprep.subr.mxu0 0.0
    %1025 = vmatpush2.xpose.msra.mxu0 0.0
    %1026 = vmatprep.subr.mxu0 0.0
    %1027 = vmatpush2.xpose.msra.mxu0 0.0
    %1028 = vmatprep.subr.mxu0 0.0
    %1029 = vmatpush2.xpose.msra.mxu0 0.0
    %1030 = vmatprep.subr.mxu0 0.0
    %1031 = vmatpush2.xpose.msra.mxu0 0.0
    %1032 = vmatprep.subr.mxu0 0.0
    %1033 = vmatpush2.xpose.msra.mxu0 0.0
    %1034 = vmatprep.subr.mxu0 0.0
    %1035 = vmatpush2.xpose.msra.mxu0 0.0
    %1036 = vmatprep.subr.mxu0 0.0
    %1037 = vmatpush2.xpose.msra.mxu0 0.0
    %1038 = vmatprep.mubr.f32.mxu0 0.0
    %1039 = vmatmul.mubr.f32.gmra.mxu0 %v960
    %v1040 = vpop.f32.mrf.mxu0
    %v1041 = vadd.f32 %v103, %v1040
    %v1042 = vpop.f32.mrf.mxu0
    %1043 = vdwg.mxu0
    %v1044 = vsel %vm155, %v1041, -inf
    %1045 = vmax.xlane.f32.xlu0 %v1044
    %v1046 = vpop.xlane.xlu0 %1045
    %v1047 = vsub.f32 %v1041, %v1046
    %v1048 = vmul.f32 %v1047, 1.442695
    %v1049 = vpow.pop %v1048
    %v1051 = vsel %vm155, %v1049, 0
    %1053 = vmatprep.subr.mxu0 0.0
    %1054 = vmatpush1.msra.mxu0 0.0
    %1055 = vmatprep.subr.mxu0 0.0
    %1056 = vmatpush1.msra.mxu0 0.0
    %1057 = vmatprep.subr.mxu0 0.0
    %1058 = vmatpush1.msra.mxu0 0.0
    %1059 = vmatprep.subr.mxu0 0.0
    %1060 = vmatpush1.msra.mxu0 0.0
    %1061 = vmatprep.subr.mxu0 0.0
    %1062 = vmatpush1.msra.mxu0 0.0
    %1063 = vmatprep.subr.mxu0 0.0
    %1064 = vmatpush1.msra.mxu0 0.0
    %1065 = vmatprep.subr.mxu0 0.0
    %1066 = vmatpush1.msra.mxu0 0.0
    %1067 = vmatprep.subr.mxu0 0.0
    %1068 = vmatpush1.msra.mxu0 0.0
    %1069 = vmatprep.subr.mxu0 0.0
    %1070 = vmatpush1.msra.mxu0 0.0
    %1071 = vmatprep.subr.mxu0 0.0
    %1072 = vmatpush1.msra.mxu0 0.0
    %1073 = vmatprep.subr.mxu0 0.0
    %1074 = vmatpush1.msra.mxu0 0.0
    %1075 = vmatprep.subr.mxu0 0.0
    %1076 = vmatpush1.msra.mxu0 0.0
    %1077 = vmatprep.subr.mxu0 %v958
    %1078 = vmatpush1.msra.mxu0 %v111
    %1079 = vmatprep.subr.mxu0 %v957
    %1080 = vmatpush1.msra.mxu0 %v110
    %1081 = vmatprep.subr.mxu0 %v956
    %1082 = vmatpush1.msra.mxu0 %v109
    %1083 = vmatprep.subr.mxu0 %v955
    %1084 = vmatpush1.msra.mxu0 %v108
    %1085 = vmatprep.subr.mxu0 0.0
    %1086 = vmatpush2.msra.mxu0 0.0
    %1087 = vmatprep.subr.mxu0 0.0
    %1088 = vmatpush2.msra.mxu0 0.0
    %1089 = vmatprep.subr.mxu0 0.0
    %1090 = vmatpush2.msra.mxu0 0.0
    %1091 = vmatprep.subr.mxu0 0.0
    %1092 = vmatpush2.msra.mxu0 0.0
    %1093 = vmatprep.subr.mxu0 0.0
    %1094 = vmatpush2.msra.mxu0 0.0
    %1095 = vmatprep.subr.mxu0 0.0
    %1096 = vmatpush2.msra.mxu0 0.0
    %1097 = vmatprep.subr.mxu0 0.0
    %1098 = vmatpush2.msra.mxu0 0.0
    %1099 = vmatprep.subr.mxu0 0.0
    %1100 = vmatpush2.msra.mxu0 0.0
    %1101 = vmatprep.subr.mxu0 0.0
    %1102 = vmatpush2.msra.mxu0 0.0
    %1103 = vmatprep.subr.mxu0 0.0
    %1104 = vmatpush2.msra.mxu0 0.0
    %1105 = vmatprep.subr.mxu0 0.0
    %1106 = vmatpush2.msra.mxu0 0.0
    %1107 = vmatprep.subr.mxu0 0.0
    %1108 = vmatpush2.msra.mxu0 0.0
    %1109 = vmatprep.subr.mxu0 0.0
    %1110 = vmatpush2.msra.mxu0 0.0
    %1111 = vmatprep.subr.mxu0 0.0
    %1112 = vmatpush2.msra.mxu0 0.0
    %1113 = vmatprep.subr.mxu0 0.0
    %1114 = vmatpush2.msra.mxu0 0.0
    %1115 = vmatprep.subr.mxu0 0.0
    %1116 = vmatpush2.msra.mxu0 0.0
    %1117 = vmatprep.mubr.f32.mxu0 0.0
    %1118 = vmatmul.mubr.f32.gmra.mxu0 %v1051
    %v1119 = vpop.f32.mrf.mxu0
    %v1120 = vadd.f32 0.0, %v1119
    %v1121 = vpop.f32.mrf.mxu0
    %v1122 = vadd.f32 0.0, %v1121
    %1123 = vdwg.mxu0
    %v1124 = vrcp.pop %v1120
    %v1125 = vmul.f32 %v1122, %v1124
    %v1126 = vlaneseq
    %v1127 = vshrl.u32 %v1126, 7
    %v1128 = vsub.s32 1, %v1127
    %v1129 = vrot.slane %v762, %v1128
    %v1131 = vsel %vm155, %v1125, 0
    %1133 = vmatprep.subr.mxu0 0.0
    %1134 = vmatpush1.msra.mxu0 0.0
    %1135 = vmatprep.subr.mxu0 0.0
    %1136 = vmatpush1.msra.mxu0 0.0
    %1137 = vmatprep.subr.mxu0 0.0
    %1138 = vmatpush1.msra.mxu0 0.0
    %1139 = vmatprep.subr.mxu0 0.0
    %1140 = vmatpush1.msra.mxu0 0.0
    %1141 = vmatprep.subr.mxu0 0.0
    %1142 = vmatpush1.msra.mxu0 0.0
    %1143 = vmatprep.subr.mxu0 0.0
    %1144 = vmatpush1.msra.mxu0 0.0
    %1145 = vmatprep.subr.mxu0 0.0
    %1146 = vmatpush1.msra.mxu0 0.0
    %1147 = vmatprep.subr.mxu0 0.0
    %1148 = vmatpush1.msra.mxu0 0.0
    %1149 = vmatprep.subr.mxu0 0.0
    %1150 = vmatpush1.msra.mxu0 0.0
    %1151 = vmatprep.subr.mxu0 0.0
    %1152 = vmatpush1.msra.mxu0 0.0
    %1153 = vmatprep.subr.mxu0 0.0
    %1154 = vmatpush1.msra.mxu0 0.0
    %1155 = vmatprep.subr.mxu0 0.0
    %1156 = vmatpush1.msra.mxu0 0.0
    %1157 = vmatprep.subr.mxu0 0.0
    %1158 = vmatpush1.msra.mxu0 %v769
    %1159 = vmatprep.subr.mxu0 0.0
    %1160 = vmatpush1.msra.mxu0 %v768
    %1161 = vmatprep.subr.mxu0 0.0
    %1162 = vmatpush1.msra.mxu0 %v767
    %1163 = vmatprep.subr.mxu0 0.0
    %1164 = vmatpush1.msra.mxu0 %v766
    %1165 = vmatprep.subr.mxu0 0.0
    %1166 = vmatpush2.msra.mxu0 0.0
    %1167 = vmatprep.subr.mxu0 0.0
    %1168 = vmatpush2.msra.mxu0 0.0
    %1169 = vmatprep.subr.mxu0 0.0
    %1170 = vmatpush2.msra.mxu0 0.0
    %1171 = vmatprep.subr.mxu0 0.0
    %1172 = vmatpush2.msra.mxu0 0.0
    %1173 = vmatprep.subr.mxu0 0.0
    %1174 = vmatpush2.msra.mxu0 0.0
    %1175 = vmatprep.subr.mxu0 0.0
    %1176 = vmatpush2.msra.mxu0 0.0
    %1177 = vmatprep.subr.mxu0 0.0
    %1178 = vmatpush2.msra.mxu0 0.0
    %1179 = vmatprep.subr.mxu0 0.0
    %1180 = vmatpush2.msra.mxu0 0.0
    %1181 = vmatprep.subr.mxu0 0.0
    %1182 = vmatpush2.msra.mxu0 0.0
    %1183 = vmatprep.subr.mxu0 0.0
    %1184 = vmatpush2.msra.mxu0 0.0
    %1185 = vmatprep.subr.mxu0 0.0
    %1186 = vmatpush2.msra.mxu0 0.0
    %1187 = vmatprep.subr.mxu0 0.0
    %1188 = vmatpush2.msra.mxu0 0.0
    %1189 = vmatprep.subr.mxu0 0.0
    %1190 = vmatpush2.msra.mxu0 0.0
    %1191 = vmatprep.subr.mxu0 0.0
    %1192 = vmatpush2.msra.mxu0 0.0
    %1193 = vmatprep.subr.mxu0 0.0
    %1194 = vmatpush2.msra.mxu0 0.0
    %1195 = vmatprep.subr.mxu0 0.0
    %1196 = vmatpush2.msra.mxu0 0.0
    %1197 = vmatprep.mubr.f32.mxu0 0.0
    %1198 = vmatmul.mubr.f32.gmra.mxu0 %v1131
    %v1199 = vpop.f32.mrf.mxu0
    %v1200 = vadd.f32 %v1129, %v1199
    %v1201 = vpop.f32.mrf.mxu0
    %1202 = vdwg.mxu0
    %v1203 = vadd.f32 %v760, %v1200
    %v1204 = vsel %vm155, %v1203, 0.0
    %1205 = vadd.xlane.f32.xlu0 %v1204
    %v1206 = vpop.xlane.xlu0 %1205
    %v1207 = vmul.f32 %v1206, %v556
    %v1208 = vmul.f32 %v1203, %v1203
    %v1209 = vsel %vm155, %v1208, 0.0
    %1210 = vadd.xlane.f32.xlu0 %v1209
    %v1211 = vpop.xlane.xlu0 %1210
    %v1212 = vmul.f32 %v1211, %v556
    %v1213 = vmul.f32 %v1207, %v1207
    %v1214 = vsub.f32 %v1212, %v1213
    %v1215 = vsub.f32 %v1203, %v1207
    %v1216 = vadd.f32 %v1214, 1e-05
    %v1217 = vrsqrt.pop %v1216
    %v1218 = vmul.f32 %v1215, %v1217
    %v1219 = vlaneseq
    %v1220 = vshrl.u32 %v1219, 7
    %v1221 = vsub.s32 4, %v1220
    %v1222 = vrot.slane %v762, %v1221
    %v1223 = vmul.f32 %v1218, %v1222
    %v1224 = vlaneseq
    %v1225 = vshrl.u32 %v1224, 7
    %v1226 = vsub.s32 5, %v1225
    %v1227 = vrot.slane %v762, %v1226
    %v1228 = vadd.f32 %v1223, %v1227
    %v1229 = vlaneseq
    %v1230 = vshrl.u32 %v1229, 7
    %v1231 = vsub.s32 2, %v1230
    %v1232 = vrot.slane %v762, %v1231
    %v1234 = vsel %vm155, %v1228, 0
    %1236 = vmatprep.subr.mxu0 0.0
    %1237 = vmatpush1.msra.mxu0 0.0
    %1238 = vmatprep.subr.mxu0 0.0
    %1239 = vmatpush1.msra.mxu0 0.0
    %1240 = vmatprep.subr.mxu0 0.0
    %1241 = vmatpush1.msra.mxu0 0.0
    %1242 = vmatprep.subr.mxu0 0.0
    %1243 = vmatpush1.msra.mxu0 0.0
    %1244 = vmatprep.subr.mxu0 0.0
    %1245 = vmatpush1.msra.mxu0 0.0
    %1246 = vmatprep.subr.mxu0 0.0
    %1247 = vmatpush1.msra.mxu0 0.0
    %1248 = vmatprep.subr.mxu0 0.0
    %1249 = vmatpush1.msra.mxu0 0.0
    %1250 = vmatprep.subr.mxu0 0.0
    %1251 = vmatpush1.msra.mxu0 0.0
    %1252 = vmatprep.subr.mxu0 0.0
    %1253 = vmatpush1.msra.mxu0 0.0
    %1254 = vmatprep.subr.mxu0 0.0
    %1255 = vmatpush1.msra.mxu0 0.0
    %1256 = vmatprep.subr.mxu0 0.0
    %1257 = vmatpush1.msra.mxu0 0.0
    %1258 = vmatprep.subr.mxu0 0.0
    %1259 = vmatpush1.msra.mxu0 0.0
    %1260 = vmatprep.subr.mxu0 0.0
    %1261 = vmatpush1.msra.mxu0 %v773
    %1262 = vmatprep.subr.mxu0 0.0
    %1263 = vmatpush1.msra.mxu0 %v772
    %1264 = vmatprep.subr.mxu0 0.0
    %1265 = vmatpush1.msra.mxu0 %v771
    %1266 = vmatprep.subr.mxu0 0.0
    %1267 = vmatpush1.msra.mxu0 %v770
    %1268 = vmatprep.subr.mxu0 0.0
    %1269 = vmatpush2.msra.mxu0 0.0
    %1270 = vmatprep.subr.mxu0 0.0
    %1271 = vmatpush2.msra.mxu0 0.0
    %1272 = vmatprep.subr.mxu0 0.0
    %1273 = vmatpush2.msra.mxu0 0.0
    %1274 = vmatprep.subr.mxu0 0.0
    %1275 = vmatpush2.msra.mxu0 0.0
    %1276 = vmatprep.subr.mxu0 0.0
    %1277 = vmatpush2.msra.mxu0 0.0
    %1278 = vmatprep.subr.mxu0 0.0
    %1279 = vmatpush2.msra.mxu0 0.0
    %1280 = vmatprep.subr.mxu0 0.0
    %1281 = vmatpush2.msra.mxu0 0.0
    %1282 = vmatprep.subr.mxu0 0.0
    %1283 = vmatpush2.msra.mxu0 0.0
    %1284 = vmatprep.subr.mxu0 0.0
    %1285 = vmatpush2.msra.mxu0 0.0
    %1286 = vmatprep.subr.mxu0 0.0
    %1287 = vmatpush2.msra.mxu0 0.0
    %1288 = vmatprep.subr.mxu0 0.0
    %1289 = vmatpush2.msra.mxu0 0.0
    %1290 = vmatprep.subr.mxu0 0.0
    %1291 = vmatpush2.msra.mxu0 0.0
    %1292 = vmatprep.subr.mxu0 0.0
    %1293 = vmatpush2.msra.mxu0 0.0
    %1294 = vmatprep.subr.mxu0 0.0
    %1295 = vmatpush2.msra.mxu0 0.0
    %1296 = vmatprep.subr.mxu0 0.0
    %1297 = vmatpush2.msra.mxu0 0.0
    %1298 = vmatprep.subr.mxu0 0.0
    %1299 = vmatpush2.msra.mxu0 0.0
    %1300 = vmatprep.mubr.f32.mxu0 0.0
    %1301 = vmatmul.mubr.f32.gmra.mxu0 %v1234
    %v1302 = vpop.f32.mrf.mxu0
    %v1303 = vadd.f32 %v1232, %v1302
    %v1304 = vpop.f32.mrf.mxu0
    %1305 = vdwg.mxu0
    %v1306 = vmax.f32 %v1303, 0.0
    %v1307 = vlaneseq
    %v1308 = vshrl.u32 %v1307, 7
    %v1309 = vsub.s32 3, %v1308
    %v1310 = vrot.slane %v762, %v1309
    %v1312 = vsel %vm661, %v1306, 0
    %1314 = vmatprep.subr.mxu0 0.0
    %1315 = vmatpush1.msra.mxu0 0.0
    %1316 = vmatprep.subr.mxu0 0.0
    %1317 = vmatpush1.msra.mxu0 0.0
    %1318 = vmatprep.subr.mxu0 0.0
    %1319 = vmatpush1.msra.mxu0 0.0
    %1320 = vmatprep.subr.mxu0 0.0
    %1321 = vmatpush1.msra.mxu0 0.0
    %1322 = vmatprep.subr.mxu0 0.0
    %1323 = vmatpush1.msra.mxu0 0.0
    %1324 = vmatprep.subr.mxu0 0.0
    %1325 = vmatpush1.msra.mxu0 0.0
    %1326 = vmatprep.subr.mxu0 0.0
    %1327 = vmatpush1.msra.mxu0 0.0
    %1328 = vmatprep.subr.mxu0 0.0
    %1329 = vmatpush1.msra.mxu0 0.0
    %1330 = vmatprep.subr.mxu0 0.0
    %1331 = vmatpush1.msra.mxu0 %v781
    %1332 = vmatprep.subr.mxu0 0.0
    %1333 = vmatpush1.msra.mxu0 %v780
    %1334 = vmatprep.subr.mxu0 0.0
    %1335 = vmatpush1.msra.mxu0 %v779
    %1336 = vmatprep.subr.mxu0 0.0
    %1337 = vmatpush1.msra.mxu0 %v778
    %1338 = vmatprep.subr.mxu0 0.0
    %1339 = vmatpush1.msra.mxu0 %v777
    %1340 = vmatprep.subr.mxu0 0.0
    %1341 = vmatpush1.msra.mxu0 %v776
    %1342 = vmatprep.subr.mxu0 0.0
    %1343 = vmatpush1.msra.mxu0 %v775
    %1344 = vmatprep.subr.mxu0 0.0
    %1345 = vmatpush1.msra.mxu0 %v774
    %1346 = vmatprep.subr.mxu0 0.0
    %1347 = vmatpush2.msra.mxu0 0.0
    %1348 = vmatprep.subr.mxu0 0.0
    %1349 = vmatpush2.msra.mxu0 0.0
    %1350 = vmatprep.subr.mxu0 0.0
    %1351 = vmatpush2.msra.mxu0 0.0
    %1352 = vmatprep.subr.mxu0 0.0
    %1353 = vmatpush2.msra.mxu0 0.0
    %1354 = vmatprep.subr.mxu0 0.0
    %1355 = vmatpush2.msra.mxu0 0.0
    %1356 = vmatprep.subr.mxu0 0.0
    %1357 = vmatpush2.msra.mxu0 0.0
    %1358 = vmatprep.subr.mxu0 0.0
    %1359 = vmatpush2.msra.mxu0 0.0
    %1360 = vmatprep.subr.mxu0 0.0
    %1361 = vmatpush2.msra.mxu0 0.0
    %1362 = vmatprep.subr.mxu0 0.0
    %1363 = vmatpush2.msra.mxu0 0.0
    %1364 = vmatprep.subr.mxu0 0.0
    %1365 = vmatpush2.msra.mxu0 0.0
    %1366 = vmatprep.subr.mxu0 0.0
    %1367 = vmatpush2.msra.mxu0 0.0
    %1368 = vmatprep.subr.mxu0 0.0
    %1369 = vmatpush2.msra.mxu0 0.0
    %1370 = vmatprep.subr.mxu0 0.0
    %1371 = vmatpush2.msra.mxu0 0.0
    %1372 = vmatprep.subr.mxu0 0.0
    %1373 = vmatpush2.msra.mxu0 0.0
    %1374 = vmatprep.subr.mxu0 0.0
    %1375 = vmatpush2.msra.mxu0 0.0
    %1376 = vmatprep.subr.mxu0 0.0
    %1377 = vmatpush2.msra.mxu0 0.0
    %1378 = vmatprep.mubr.f32.mxu0 0.0
    %1379 = vmatmul.mubr.f32.gmra.mxu0 %v1312
    %v1380 = vpop.f32.mrf.mxu0
    %v1381 = vadd.f32 %v1310, %v1380
    %v1382 = vpop.f32.mrf.mxu0
    %1383 = vdwg.mxu0
    %v1384 = vadd.f32 %v1228, %v1381
    %v1385 = vsel %vm155, %v1384, 0.0
    %1386 = vadd.xlane.f32.xlu0 %v1385
    %v1387 = vpop.xlane.xlu0 %1386
    %v1388 = vmul.f32 %v1387, %v556
    %v1389 = vmul.f32 %v1384, %v1384
    %v1390 = vsel %vm155, %v1389, 0.0
    %1391 = vadd.xlane.f32.xlu0 %v1390
    %v1392 = vpop.xlane.xlu0 %1391
    %v1393 = vmul.f32 %v1392, %v556
    %v1394 = vmul.f32 %v1388, %v1388
    %v1395 = vsub.f32 %v1393, %v1394
    %v1396 = vsub.f32 %v1384, %v1388
    %v1397 = vadd.f32 %v1395, 1e-05
    %v1398 = vrsqrt.pop %v1397
    %v1399 = vmul.f32 %v1396, %v1398
    %v1400 = vlaneseq
    %v1401 = vshrl.u32 %v1400, 7
    %v1402 = vsub.s32 6, %v1401
    %v1403 = vrot.slane %v762, %v1402
    %v1404 = vmul.f32 %v1399, %v1403
    %v1405 = vlaneseq
    %v1406 = vshrl.u32 %v1405, 7
    %v1407 = vsub.s32 7, %v1406
    %v1408 = vrot.slane %v762, %v1407
    %v1409 = vadd.f32 %v1404, %v1408
    %v1410 = vld [vmem:[#allocation10] sm:$0xff]
    %v1411 = vld [vmem:[#allocation10 + $0x8] sm:$0xff]
    %v1412 = vld [vmem:[#allocation10 + $0x10] sm:$0xff]
    %v1413 = vld [vmem:[#allocation10 + $0x18] sm:$0xff]
    %v1414 = vld [vmem:[%s9] sm:$0x1]
    %v1416 = vlaneseq
    %v1417 = vshrl.u32 %v1416, 7
    %v1418 = vsub.s32 0, %v1417
    %v1419 = vrot.slane %v1414, %v1418
    %v1422 = vsel %vm155, %v1409, 0
    %1424 = vmatprep.subr.mxu0 0.0
    %1425 = vmatpush1.msra.mxu0 0.0
    %1426 = vmatprep.subr.mxu0 0.0
    %1427 = vmatpush1.msra.mxu0 0.0
    %1428 = vmatprep.subr.mxu0 0.0
    %1429 = vmatpush1.msra.mxu0 0.0
    %1430 = vmatprep.subr.mxu0 0.0
    %1431 = vmatpush1.msra.mxu0 0.0
    %1432 = vmatprep.subr.mxu0 0.0
    %1433 = vmatpush1.msra.mxu0 0.0
    %1434 = vmatprep.subr.mxu0 0.0
    %1435 = vmatpush1.msra.mxu0 0.0
    %1436 = vmatprep.subr.mxu0 0.0
    %1437 = vmatpush1.msra.mxu0 0.0
    %1438 = vmatprep.subr.mxu0 0.0
    %1439 = vmatpush1.msra.mxu0 0.0
    %1440 = vmatprep.subr.mxu0 0.0
    %1441 = vmatpush1.msra.mxu0 0.0
    %1442 = vmatprep.subr.mxu0 0.0
    %1443 = vmatpush1.msra.mxu0 0.0
    %1444 = vmatprep.subr.mxu0 0.0
    %1445 = vmatpush1.msra.mxu0 0.0
    %1446 = vmatprep.subr.mxu0 0.0
    %1447 = vmatpush1.msra.mxu0 0.0
    %1448 = vmatprep.subr.mxu0 0.0
    %1449 = vmatpush1.msra.mxu0 %v1413
    %1450 = vmatprep.subr.mxu0 0.0
    %1451 = vmatpush1.msra.mxu0 %v1412
    %1452 = vmatprep.subr.mxu0 0.0
    %1453 = vmatpush1.msra.mxu0 %v1411
    %1454 = vmatprep.subr.mxu0 0.0
    %1455 = vmatpush1.msra.mxu0 %v1410
    %1456 = vmatprep.subr.mxu0 0.0
    %1457 = vmatpush2.msra.mxu0 0.0
    %1458 = vmatprep.subr.mxu0 0.0
    %1459 = vmatpush2.msra.mxu0 0.0
    %1460 = vmatprep.subr.mxu0 0.0
    %1461 = vmatpush2.msra.mxu0 0.0
    %1462 = vmatprep.subr.mxu0 0.0
    %1463 = vmatpush2.msra.mxu0 0.0
    %1464 = vmatprep.subr.mxu0 0.0
    %1465 = vmatpush2.msra.mxu0 0.0
    %1466 = vmatprep.subr.mxu0 0.0
    %1467 = vmatpush2.msra.mxu0 0.0
    %1468 = vmatprep.subr.mxu0 0.0
    %1469 = vmatpush2.msra.mxu0 0.0
    %1470 = vmatprep.subr.mxu0 0.0
    %1471 = vmatpush2.msra.mxu0 0.0
    %1472 = vmatprep.subr.mxu0 0.0
    %1473 = vmatpush2.msra.mxu0 0.0
    %1474 = vmatprep.subr.mxu0 0.0
    %1475 = vmatpush2.msra.mxu0 0.0
    %1476 = vmatprep.subr.mxu0 0.0
    %1477 = vmatpush2.msra.mxu0 0.0
    %1478 = vmatprep.subr.mxu0 0.0
    %1479 = vmatpush2.msra.mxu0 0.0
    %1480 = vmatprep.subr.mxu0 0.0
    %1481 = vmatpush2.msra.mxu0 0.0
    %1482 = vmatprep.subr.mxu0 0.0
    %1483 = vmatpush2.msra.mxu0 0.0
    %1484 = vmatprep.subr.mxu0 0.0
    %1485 = vmatpush2.msra.mxu0 0.0
    %1486 = vmatprep.subr.mxu0 0.0
    %1487 = vmatpush2.msra.mxu0 0.0
    %1488 = vmatprep.mubr.f32.mxu0 0.0
    %1489 = vmatmul.mubr.f32.gmra.mxu0 %v1422
    %v1490 = vpop.f32.mrf.mxu0
    %v1491 = vadd.f32 %v1419, %v1490
    %v1492 = vpop.f32.mrf.mxu0
    %1493 = vdwg.mxu0
    %1494 = vst [vmem:[#allocation11] sm:$0xff] %v1491
    // Predicated region
    $region62: #{causal_transformer.1} parent=1 // pred_check
      _
    $region63: #{causal_transformer.1} parent=1 // pred_check_branch
      %1496 = sbr.rel (0) target = $region65
    $region64: #{causal_transformer.1} parent=1 // pred_region
      %s1498 = ssub.s32 128, 128
      %1499 = vsyncadd [#allocation4], %s1498
      %s1501 = sshll.u32 [#allocation11], 4
      %s1502 = int_to_ptr.vmem [resolvable:$true] %s1501
      %1504 = dma.vmem_to_hbm [thread:$0]  %s1502, 128, %s10, [#allocation4]
    $region65: #{causal_transformer.1} parent=1 // pred_fallthru
      _
    // Predicated region
    $region66: #{causal_transformer.1} parent=1 // pred_check
      _
    $region67: #{causal_transformer.1} parent=1 // pred_check_branch
      %1506 = sbr.rel (0) target = $region69
    $region68: #{causal_transformer.1} parent=1 // pred_region
      %1507 = dma.done [#allocation4], 128
    $region69: #{causal_transformer.1} parent=1 // pred_fallthru
      _
    %1508 = vsyncpa [#allocation3], 1
    %1509 = vsyncpa [#allocation6], 1
    %1510 = vsyncpa [#allocation9], 1
    %1511 = vsyncpa [#allocation4], 1

</llo_original>
